<compile_context>
chip_gen: v7x
topology: tpu7x:2x2x1
jax: 0.10.0
libtpu: 0.0.40
codegen_flags: <defaults>
</compile_context>

<pallas_src>
import math
from functools import partial

import jax
import jax.numpy as jnp
from jax.experimental import pallas as pl
from jax.experimental.pallas import tpu as pltpu


def _div_tile(dim, target, quantum=128):
    """Largest tile <= target that is a multiple of `quantum` and divides
    `dim` evenly; falls back to the full dim (small / odd shapes)."""
    if dim <= target:
        return dim
    t = (target // quantum) * quantum
    while t >= quantum:
        if dim % t == 0:
            return t
        t -= quantum
    return dim


# --------------------------------------------------------------------------
# Tiled linear kernel: y = x @ W^T + b   (PyTorch nn.Linear, W: (out, in))
# --------------------------------------------------------------------------
def _linear_kernel(x_ref, w_ref, b_ref, o_ref, acc_ref):
    k = pl.program_id(2)

    @pl.when(k == 0)
    def _():
        acc_ref[...] = jnp.zeros_like(acc_ref)

    # Contract on W's second axis directly (no .T), native-dtype operands,
    # f32 accumulation on the MXU.
    acc_ref[...] += jax.lax.dot_general(
        x_ref[...], w_ref[...],
        dimension_numbers=(((1,), (1,)), ((), ())),
        preferred_element_type=jnp.float32)

    @pl.when(k == pl.num_programs(2) - 1)
    def _():
        o_ref[...] = (acc_ref[...] + b_ref[...].astype(jnp.float32)).astype(o_ref.dtype)


def linear(x2d, w, b, *, tm=512, tn=512, tk=512):
    """y = x2d @ w.T + b.  512x512x512 default tiles (review: amortizes the
    per-grid-step overhead and halves HBM re-read factors vs 256).  On v5e a
    larger tk (1024) further relieves the single vst slot when K divides."""
    M, K = x2d.shape
    N = w.shape[0]
    tm = min(tm, M)
    tn = min(tn, N)
    tk = _div_tile(K, tk, 128)
    grid = (pl.cdiv(M, tm), pl.cdiv(N, tn), K // tk)
    return pl.pallas_call(
        _linear_kernel,
        out_shape=jax.ShapeDtypeStruct((M, N), x2d.dtype),
        grid_spec=pltpu.PrefetchScalarGridSpec(
            num_scalar_prefetch=0,
            grid=grid,
            in_specs=[
                pl.BlockSpec((tm, tk), lambda i, j, k: (i, k)),
                pl.BlockSpec((tn, tk), lambda i, j, k: (j, k)),
                pl.BlockSpec((1, tn), lambda i, j, k: (0, j)),
            ],
            out_specs=pl.BlockSpec((tm, tn), lambda i, j, k: (i, j)),
            scratch_shapes=[pltpu.VMEM((tm, tn), jnp.float32)],
        ),
        compiler_params=pltpu.CompilerParams(
            dimension_semantics=("parallel", "parallel", "arbitrary")),
    )(x2d, w, b.reshape(1, N))


# --------------------------------------------------------------------------
# Flash-style GQA attention kernel.
#   One grid point handles a whole GQA group (G query heads) of a q-tile
#   against one shared K/V tile -> K/V are streamed once per group and the
#   (tq*G, hd) x (hd, tk) matmul fills the MXU.
#   q and o stay in the seq-major (B, S, NKV, G, hd) layout of the projection
#   output (no head-major activation transposes in HBM).
# --------------------------------------------------------------------------
def _gqa_flash_kernel(q_ref, k_ref, v_ref, o_ref, m_sc, l_sc, acc_sc):
    ki = pl.program_id(3)
    _, TQ, _, G, HD = q_ref.shape
    TK = k_ref.shape[2]

    @pl.when(ki == 0)
    def _():
        m_sc[...] = jnp.full_like(m_sc, -jnp.inf)
        l_sc[...] = jnp.zeros_like(l_sc)
        acc_sc[...] = jnp.zeros_like(acc_sc)

    # 1/sqrt(hd) is pre-folded into wq/bq, so no per-KV-step q scaling here.
    # Flattened rows are ordered (q_pos, head-in-group), so the result maps
    # straight back onto the seq-major output layout.
    q = q_ref[...].reshape(TQ * G, HD)                 # native dtype
    k = k_ref[...].reshape(TK, HD)
    v = v_ref[...].reshape(TK, HD)

    s = jax.lax.dot_general(
        q, k, dimension_numbers=(((1,), (1,)), ((), ())),
        preferred_element_type=jnp.float32)            # (TQ*G, TK) f32 scores
    # TODO(synk): additive attention_mask (if any) would be added to `s` here,
    # with a jnp.where guard so all -inf rows do not produce NaN below.

    m_prev = m_sc[...]
    m_new = jnp.maximum(m_prev, jnp.max(s, axis=-1, keepdims=True))
    alpha = jnp.exp(m_prev - m_new)
    p = jnp.exp(s - m_new)                             # unnormalized probabilities
    l_sc[...] = alpha * l_sc[...] + jnp.sum(p, axis=-1, keepdims=True)
    acc_sc[...] = alpha * acc_sc[...] + jax.lax.dot_general(
        p.astype(v.dtype), v, dimension_numbers=(((1,), (0,)), ((), ())),
        preferred_element_type=jnp.float32)            # (TQ*G, HD)
    m_sc[...] = m_new

    @pl.when(ki == pl.num_programs(3) - 1)
    def _():
        # Deferred softmax normalization: once per q tile -> exact reciprocal
        # is nearly free (review correctness concern about approx=True).
        inv_l = pl.reciprocal(l_sc[...], approx=False)
        o_ref[...] = (acc_sc[...] * inv_l).astype(o_ref.dtype).reshape(1, TQ, 1, G, HD)


def gqa_attention(q5, k4, v4, *, tq=None, tk=512):
    """q5: (B, S, NKV, G, hd) seq-major; k4/v4: (B, NKV, S, hd).
    Returns (B, S, NKV, G, hd) in the same seq-major layout."""
    B, S, NKV, G, HD = q5.shape
    if tq is None:
        # Keep G*tq in the 512-1024 row range (bounds the f32 score temp and
        # acc scratch while amortizing the online-softmax rescale).
        tq = max(128, 1024 // max(G, 1))
    tq = _div_tile(S, min(tq, S), 128)
    tk = _div_tile(S, tk, 128)
    grid = (B, NKV, S // tq, S // tk)
    # TODO(synk): if a trace shows exposed K/V DMA at small hd, add
    # pipeline_mode=pl.Buffered(3) to the K/V BlockSpecs.
    return pl.pallas_call(
        _gqa_flash_kernel,
        out_shape=jax.ShapeDtypeStruct((B, S, NKV, G, HD), q5.dtype),
        grid_spec=pltpu.PrefetchScalarGridSpec(
            num_scalar_prefetch=0,
            grid=grid,
            in_specs=[
                pl.BlockSpec((1, tq, 1, G, HD),
                             lambda b, h, qi, ki: (b, qi, h, 0, 0)),
                pl.BlockSpec((1, 1, tk, HD),
                             lambda b, h, qi, ki: (b, h, ki, 0)),
                pl.BlockSpec((1, 1, tk, HD),
                             lambda b, h, qi, ki: (b, h, ki, 0)),
            ],
            out_specs=pl.BlockSpec((1, tq, 1, G, HD),
                                   lambda b, h, qi, ki: (b, qi, h, 0, 0)),
            scratch_shapes=[
                pltpu.VMEM((tq * G, 1), jnp.float32),   # running max m
                pltpu.VMEM((tq * G, 1), jnp.float32),   # running sum l
                pltpu.VMEM((tq * G, HD), jnp.float32),  # output accumulator
            ],
        ),
        compiler_params=pltpu.CompilerParams(
            dimension_semantics=("parallel", "parallel", "parallel", "arbitrary")),
    )(q5, k4, v4)


# --------------------------------------------------------------------------
# One-time weight preparation (call OUTSIDE the jitted forward).
# --------------------------------------------------------------------------
def prepare_params(params, num_heads):
    """Folds 1/sqrt(head_dim) into wq/bq and fuses wk/wv into one projection.
    Doing this once up front removes the per-call weight concatenation (a full
    HBM copy of the projection weights every forward)."""
    hidden = params["wq"].shape[1]
    hd = hidden // num_heads
    scale = 1.0 / math.sqrt(hd)
    return {
        "wq": params["wq"] * scale,
        "bq": params["bq"] * scale,
        "wkv": jnp.concatenate([params["wk"], params["wv"]], axis=0),
        "bkv": jnp.concatenate([params["bk"], params["bv"]], axis=0),
        "wo": params["wo"],
        "bo": params["bo"],
    }


# --------------------------------------------------------------------------
# Full module forward
# --------------------------------------------------------------------------
def gqa_forward(x, prep, num_heads, num_kv_heads):
    B, S, H = x.shape
    hd = H // num_heads
    G = num_heads // num_kv_heads
    NKV = num_kv_heads
    kv_dim = hd * NKV

    x2d = x.reshape(B * S, H)

    # Projections: attention scale pre-folded into wq; k/v fused so x is
    # streamed once for both and weights are never concatenated per call.
    q2d = linear(x2d, prep["wq"], prep["bq"])          # (B*S, H)
    kv2d = linear(x2d, prep["wkv"], prep["bkv"])       # (B*S, 2*kv_dim)

    # q stays in seq-major (B, S, NKV, G, hd) -- a FREE reshape of the
    # projection output; the attention kernel writes back in the same layout
    # so the output projection needs no head-major transpose either.
    q5 = q2d.reshape(B, S, NKV, G, hd)
    # K/V transposes are 1/G the size of the activations; left to XLA.
    k4 = kv2d[:, :kv_dim].reshape(B, S, NKV, hd).transpose(0, 2, 1, 3)
    v4 = kv2d[:, kv_dim:].reshape(B, S, NKV, hd).transpose(0, 2, 1, 3)

    attn = gqa_attention(q5, k4, v4)                   # (B, S, NKV, G, hd)
    attn2d = attn.reshape(B * S, H)                    # free reshape

    # Dropout: identity in eval / p=0.0 (matches F.dropout(..., training)).
    return linear(attn2d, prep["wo"], prep["bo"]).reshape(B, S, H)


# --------------------------------------------------------------------------
# Pure-JAX reference (mirrors the PyTorch forward) for correctness check
# --------------------------------------------------------------------------
def gqa_reference(x, params, num_heads, num_kv_heads):
    B, S, H = x.shape
    hd = H // num_heads
    group = num_heads // num_kv_heads

    def lin(x2, w, b):
        return x2 @ w.T + b

    q = lin(x, params["wq"], params["bq"]).reshape(B, S, num_heads, hd).transpose(0, 2, 1, 3)
    k = lin(x, params["wk"], params["bk"]).reshape(B, S, num_kv_heads, hd).transpose(0, 2, 1, 3)
    v = lin(x, params["wv"], params["bv"]).reshape(B, S, num_kv_heads, hd).transpose(0, 2, 1, 3)
    k = jnp.repeat(k, group, axis=1)
    v = jnp.repeat(v, group, axis=1)
    scores = jnp.einsum("bhqd,bhkd->bhqk", q, k) / math.sqrt(hd)
    w = jax.nn.softmax(scores, axis=-1)
    o = jnp.einsum("bhqk,bhkd->bhqd", w, v)
    o = o.transpose(0, 2, 1, 3).reshape(B, S, H)
    return lin(o, params["wo"], params["bo"])


# --------------------------------------------------------------------------
def init_params(key, hidden_size, num_heads, num_kv_heads, dtype=jnp.float32):
    kv_dim = hidden_size * num_kv_heads // num_heads
    keys = jax.random.split(key, 8)

    def uni(k, shape, fan_in):
        bound = 1.0 / math.sqrt(fan_in)
        return jax.random.uniform(k, shape, dtype=dtype, minval=-bound, maxval=bound)

    return {
        "wq": uni(keys[0], (hidden_size, hidden_size), hidden_size),
        "bq": uni(keys[1], (hidden_size,), hidden_size),
        "wk": uni(keys[2], (kv_dim, hidden_size), hidden_size),
        "bk": uni(keys[3], (kv_dim,), hidden_size),
        "wv": uni(keys[4], (kv_dim, hidden_size), hidden_size),
        "bv": uni(keys[5], (kv_dim,), hidden_size),
        "wo": uni(keys[6], (hidden_size, hidden_size), hidden_size),
        "bo": uni(keys[7], (hidden_size,), hidden_size),
    }


if __name__ == "__main__":
    # Small config: hidden=32, 4 query heads, 2 kv heads, head_dim=8
    B, S, H = 2, 8, 32
    NUM_HEADS, NUM_KV_HEADS = 4, 2

    key = jax.random.PRNGKey(0)
    kx, kp = jax.random.split(key)
    x = jax.random.normal(kx, (B, S, H), dtype=jnp.float32)
    params = init_params(kp, H, NUM_HEADS, NUM_KV_HEADS)

    # One-time weight transform OUTSIDE the jitted forward (no per-call concat).
    prep = prepare_params(params, NUM_HEADS)

    fwd = jax.jit(partial(gqa_forward, num_heads=NUM_HEADS, num_kv_heads=NUM_KV_HEADS))
    out = jax.block_until_ready(fwd(x, prep))

    ref = gqa_reference(x, params, NUM_HEADS, NUM_KV_HEADS)
    assert out.shape == (B, S, H)
    max_err = float(jnp.max(jnp.abs(out - ref)))
    assert jnp.allclose(out, ref, atol=1e-2, rtol=1e-2), \
        f"mismatch vs reference (max abs err {max_err})"

    print("KERNEL_OK")
</pallas_src>

<mosaic_0001>
module attributes {stable_mosaic.version = 11 : i64} {
  func.func @_linear_kernel(%arg0: i32, %arg1: i32, %arg2: i32, %arg3: memref<16x32xf32, #tpu.memory_space<vmem>>, %arg4: memref<32x32xf32, #tpu.memory_space<vmem>>, %arg5: memref<1x32xf32, #tpu.memory_space<vmem>>, %arg6: memref<16x32xf32, #tpu.memory_space<vmem>>, %arg7: memref<16x32xf32, #tpu.memory_space<vmem>>) attributes {dimension_semantics = [#tpu.dimension_semantics<parallel>, #tpu.dimension_semantics<parallel>, #tpu.dimension_semantics<arbitrary>], iteration_bounds = array<i64: 1, 1, 1>, scalar_prefetch = 0 : i64, scratch_operands = 1 : i64, tpu.core_type = #tpu.core_type<tc>, window_params = [{transform_indices = @transform_0, window_bounds = array<i64: 16, 32>}, {transform_indices = @transform_1, window_bounds = array<i64: 32, 32>}, {transform_indices = @transform_2, window_bounds = array<i64: 1, 32>}, {transform_indices = @transform_3, window_bounds = array<i64: 16, 32>}]} {
    %c0_i32 = arith.constant 0 : i32
    %0 = arith.cmpi eq, %arg2, %c0_i32 : i32
    %1 = arith.extui %0 : i1 to i32
    %c0_i32_0 = arith.constant 0 : i32
    %2 = arith.cmpi ne, %1, %c0_i32_0 : i32
    scf.if %2 {
      %cst_10 = arith.constant 0.000000e+00 : f32
      %12 = vector.broadcast %cst_10 : f32 to vector<16x32xf32>
      %c0_11 = arith.constant 0 : index
      %c0_12 = arith.constant 0 : index
      %13 = vector.load %arg7[%c0_11, %c0_12] : memref<16x32xf32, #tpu.memory_space<vmem>>, vector<16x32xf32>
      tpu.vector_store %arg7[%c0_11, %c0_12], %12 {strides = array<i32>} : memref<16x32xf32, #tpu.memory_space<vmem>>, vector<16x32xf32>,
    } else {
    }
    %c0 = arith.constant 0 : index
    %c0_1 = arith.constant 0 : index
    %3 = vector.load %arg7[%c0, %c0_1] : memref<16x32xf32, #tpu.memory_space<vmem>>, vector<16x32xf32>
    %c0_2 = arith.constant 0 : index
    %c0_3 = arith.constant 0 : index
    %4 = vector.load %arg3[%c0_2, %c0_3] : memref<16x32xf32, #tpu.memory_space<vmem>>, vector<16x32xf32>
    %c0_4 = arith.constant 0 : index
    %c0_5 = arith.constant 0 : index
    %5 = vector.load %arg4[%c0_4, %c0_5] : memref<32x32xf32, #tpu.memory_space<vmem>>, vector<32x32xf32>
    %cst = arith.constant dense<0.000000e+00> : vector<16x32xf32>
    %6 = tpu.matmul %4, %5, %cst {dimension_numbers = #tpu.dot_dimension_numbers<[1], [1], [0], [0], [0, 0, 1, 0], [], []>} : vector<16x32xf32>, vector<32x32xf32>, vector<16x32xf32> -> vector<16x32xf32>
    %7 = arith.addf %3, %6 : vector<16x32xf32>
    %c0_6 = arith.constant 0 : index
    %c0_7 = arith.constant 0 : index
    %8 = vector.load %arg7[%c0_6, %c0_7] : memref<16x32xf32, #tpu.memory_space<vmem>>, vector<16x32xf32>
    tpu.vector_store %arg7[%c0_6, %c0_7], %7 {strides = array<i32>} : memref<16x32xf32, #tpu.memory_space<vmem>>, vector<16x32xf32>,
    %c0_i32_8 = arith.constant 0 : i32
    %9 = arith.cmpi eq, %arg2, %c0_i32_8 : i32
    %10 = arith.extui %9 : i1 to i32
    %c0_i32_9 = arith.constant 0 : i32
    %11 = arith.cmpi ne, %10, %c0_i32_9 : i32
    scf.if %11 {
      %c0_10 = arith.constant 0 : index
      %c0_11 = arith.constant 0 : index
      %12 = vector.load %arg7[%c0_10, %c0_11] : memref<16x32xf32, #tpu.memory_space<vmem>>, vector<16x32xf32>
      %c0_12 = arith.constant 0 : index
      %c0_13 = arith.constant 0 : index
      %13 = vector.load %arg5[%c0_12, %c0_13] : memref<1x32xf32, #tpu.memory_space<vmem>>, vector<1x32xf32>
      %14 = vector.broadcast %13 : vector<1x32xf32> to vector<16x32xf32>
      %15 = arith.addf %12, %14 : vector<16x32xf32>
      %c0_14 = arith.constant 0 : index
      %c0_15 = arith.constant 0 : index
      %16 = vector.load %arg6[%c0_14, %c0_15] : memref<16x32xf32, #tpu.memory_space<vmem>>, vector<16x32xf32>
      tpu.vector_store %arg6[%c0_14, %c0_15], %15 {strides = array<i32>} : memref<16x32xf32, #tpu.memory_space<vmem>>, vector<16x32xf32>,
    } else {
    }
    return
  }
  func.func @transform_0(%arg0: i32, %arg1: i32, %arg2: i32) -> (i32, i32) {
    %c0_i32 = arith.constant 0 : i32
    return %arg0, %arg2 : i32, i32
  }
  func.func @transform_1(%arg0: i32, %arg1: i32, %arg2: i32) -> (i32, i32) {
    %c0_i32 = arith.constant 0 : i32
    return %arg1, %arg2 : i32, i32
  }
  func.func @transform_2(%arg0: i32, %arg1: i32, %arg2: i32) -> (i32, i32) {
    %c0_i32 = arith.constant 0 : i32
    %c0_i32_0 = arith.constant 0 : i32
    return %c0_i32, %arg1 : i32, i32
  }
  func.func @transform_3(%arg0: i32, %arg1: i32, %arg2: i32) -> (i32, i32) {
    %c0_i32 = arith.constant 0 : i32
    return %arg0, %arg1 : i32, i32
  }
}

module attributes {stable_mosaic.version = 11 : i64} {
  func.func @_linear_kernel(%arg0: i32, %arg1: i32, %arg2: i32, %arg3: memref<16x32xf32, #tpu.memory_space<vmem>>, %arg4: memref<32x32xf32, #tpu.memory_space<vmem>>, %arg5: memref<1x32xf32, #tpu.memory_space<vmem>>, %arg6: memref<16x32xf32, #tpu.memory_space<vmem>>, %arg7: memref<16x32xf32, #tpu.memory_space<vmem>>) attributes {dimension_semantics = [#tpu.dimension_semantics<parallel>, #tpu.dimension_semantics<parallel>, #tpu.dimension_semantics<arbitrary>], iteration_bounds = array<i64: 1, 1, 1>, scalar_prefetch = 0 : i64, scratch_operands = 1 : i64, tpu.core_type = #tpu.core_type<tc>, window_params = [{transform_indices = @transform_0, window_bounds = array<i64: 16, 32>}, {transform_indices = @transform_1, window_bounds = array<i64: 32, 32>}, {transform_indices = @transform_2, window_bounds = array<i64: 1, 32>}, {transform_indices = @transform_3, window_bounds = array<i64: 16, 32>}]} {
    %c0_i32 = arith.constant 0 : i32
    %0 = arith.cmpi eq, %arg2, %c0_i32 : i32
    %1 = arith.extui %0 : i1 to i32
    %c0_i32_0 = arith.constant 0 : i32
    %2 = arith.cmpi ne, %1, %c0_i32_0 : i32
    scf.if %2 {
      %cst_10 = arith.constant 0.000000e+00 : f32
      %12 = vector.broadcast %cst_10 : f32 to vector<16x32xf32>
      %c0_11 = arith.constant 0 : index
      %c0_12 = arith.constant 0 : index
      %13 = vector.load %arg7[%c0_11, %c0_12] : memref<16x32xf32, #tpu.memory_space<vmem>>, vector<16x32xf32>
      tpu.vector_store %arg7[%c0_11, %c0_12], %12 {strides = array<i32>} : memref<16x32xf32, #tpu.memory_space<vmem>>, vector<16x32xf32>,
    } else {
    }
    %c0 = arith.constant 0 : index
    %c0_1 = arith.constant 0 : index
    %3 = vector.load %arg7[%c0, %c0_1] : memref<16x32xf32, #tpu.memory_space<vmem>>, vector<16x32xf32>
    %c0_2 = arith.constant 0 : index
    %c0_3 = arith.constant 0 : index
    %4 = vector.load %arg3[%c0_2, %c0_3] : memref<16x32xf32, #tpu.memory_space<vmem>>, vector<16x32xf32>
    %c0_4 = arith.constant 0 : index
    %c0_5 = arith.constant 0 : index
    %5 = vector.load %arg4[%c0_4, %c0_5] : memref<32x32xf32, #tpu.memory_space<vmem>>, vector<32x32xf32>
    %cst = arith.constant dense<0.000000e+00> : vector<16x32xf32>
    %6 = tpu.matmul %4, %5, %cst {dimension_numbers = #tpu.dot_dimension_numbers<[1], [1], [0], [0], [0, 0, 1, 0], [], []>} : vector<16x32xf32>, vector<32x32xf32>, vector<16x32xf32> -> vector<16x32xf32>
    %7 = arith.addf %3, %6 : vector<16x32xf32>
    %c0_6 = arith.constant 0 : index
    %c0_7 = arith.constant 0 : index
    %8 = vector.load %arg7[%c0_6, %c0_7] : memref<16x32xf32, #tpu.memory_space<vmem>>, vector<16x32xf32>
    tpu.vector_store %arg7[%c0_6, %c0_7], %7 {strides = array<i32>} : memref<16x32xf32, #tpu.memory_space<vmem>>, vector<16x32xf32>,
    %c0_i32_8 = arith.constant 0 : i32
    %9 = arith.cmpi eq, %arg2, %c0_i32_8 : i32
    %10 = arith.extui %9 : i1 to i32
    %c0_i32_9 = arith.constant 0 : i32
    %11 = arith.cmpi ne, %10, %c0_i32_9 : i32
    scf.if %11 {
      %c0_10 = arith.constant 0 : index
      %c0_11 = arith.constant 0 : index
      %12 = vector.load %arg7[%c0_10, %c0_11] : memref<16x32xf32, #tpu.memory_space<vmem>>, vector<16x32xf32>
      %c0_12 = arith.constant 0 : index
      %c0_13 = arith.constant 0 : index
      %13 = vector.load %arg5[%c0_12, %c0_13] : memref<1x32xf32, #tpu.memory_space<vmem>>, vector<1x32xf32>
      %14 = vector.broadcast %13 : vector<1x32xf32> to vector<16x32xf32>
      %15 = arith.addf %12, %14 : vector<16x32xf32>
      %c0_14 = arith.constant 0 : index
      %c0_15 = arith.constant 0 : index
      %16 = vector.load %arg6[%c0_14, %c0_15] : memref<16x32xf32, #tpu.memory_space<vmem>>, vector<16x32xf32>
      tpu.vector_store %arg6[%c0_14, %c0_15], %15 {strides = array<i32>} : memref<16x32xf32, #tpu.memory_space<vmem>>, vector<16x32xf32>,
    } else {
    }
    return
  }
  func.func @transform_0(%arg0: i32, %arg1: i32, %arg2: i32) -> (i32, i32) {
    %c0_i32 = arith.constant 0 : i32
    return %arg0, %arg2 : i32, i32
  }
  func.func @transform_1(%arg0: i32, %arg1: i32, %arg2: i32) -> (i32, i32) {
    %c0_i32 = arith.constant 0 : i32
    return %arg1, %arg2 : i32, i32
  }
  func.func @transform_2(%arg0: i32, %arg1: i32, %arg2: i32) -> (i32, i32) {
    %c0_i32 = arith.constant 0 : i32
    %c0_i32_0 = arith.constant 0 : i32
    return %c0_i32, %arg1 : i32, i32
  }
  func.func @transform_3(%arg0: i32, %arg1: i32, %arg2: i32) -> (i32, i32) {
    %c0_i32 = arith.constant 0 : i32
    return %arg0, %arg1 : i32, i32
  }
}

module attributes {stable_mosaic.version = 11 : i64} {
  func.func @_linear_kernel(%arg0: i32, %arg1: i32, %arg2: i32, %arg3: memref<16x32xf32, #tpu.memory_space<vmem>>, %arg4: memref<32x32xf32, #tpu.memory_space<vmem>>, %arg5: memref<1x32xf32, #tpu.memory_space<vmem>>, %arg6: memref<16x32xf32, #tpu.memory_space<vmem>>, %arg7: memref<16x32xf32, #tpu.memory_space<vmem>>) attributes {dimension_semantics = [#tpu.dimension_semantics<parallel>, #tpu.dimension_semantics<parallel>, #tpu.dimension_semantics<arbitrary>], iteration_bounds = array<i64: 1, 1, 1>, scalar_prefetch = 0 : i64, scratch_operands = 1 : i64, tpu.core_type = #tpu.core_type<tc>, window_params = [{transform_indices = @transform_0, window_bounds = array<i64: 16, 32>}, {transform_indices = @transform_1, window_bounds = array<i64: 32, 32>}, {transform_indices = @transform_2, window_bounds = array<i64: 1, 32>}, {transform_indices = @transform_3, window_bounds = array<i64: 16, 32>}]} {
    %c0_i32 = arith.constant 0 : i32
    %0 = arith.cmpi eq, %arg2, %c0_i32 : i32
    %1 = arith.extui %0 : i1 to i32
    %c0_i32_0 = arith.constant 0 : i32
    %2 = arith.cmpi ne, %1, %c0_i32_0 : i32
    scf.if %2 {
      %cst_10 = arith.constant 0.000000e+00 : f32
      %12 = vector.broadcast %cst_10 : f32 to vector<16x32xf32>
      %c0_11 = arith.constant 0 : index
      %c0_12 = arith.constant 0 : index
      %13 = vector.load %arg7[%c0_11, %c0_12] : memref<16x32xf32, #tpu.memory_space<vmem>>, vector<16x32xf32>
      tpu.vector_store %arg7[%c0_11, %c0_12], %12 {strides = array<i32>} : memref<16x32xf32, #tpu.memory_space<vmem>>, vector<16x32xf32>,
    } else {
    }
    %c0 = arith.constant 0 : index
    %c0_1 = arith.constant 0 : index
    %3 = vector.load %arg7[%c0, %c0_1] : memref<16x32xf32, #tpu.memory_space<vmem>>, vector<16x32xf32>
    %c0_2 = arith.constant 0 : index
    %c0_3 = arith.constant 0 : index
    %4 = vector.load %arg3[%c0_2, %c0_3] : memref<16x32xf32, #tpu.memory_space<vmem>>, vector<16x32xf32>
    %c0_4 = arith.constant 0 : index
    %c0_5 = arith.constant 0 : index
    %5 = vector.load %arg4[%c0_4, %c0_5] : memref<32x32xf32, #tpu.memory_space<vmem>>, vector<32x32xf32>
    %cst = arith.constant dense<0.000000e+00> : vector<16x32xf32>
    %6 = tpu.matmul %4, %5, %cst {dimension_numbers = #tpu.dot_dimension_numbers<[1], [1], [0], [0], [0, 0, 1, 0], [], []>} : vector<16x32xf32>, vector<32x32xf32>, vector<16x32xf32> -> vector<16x32xf32>
    %7 = arith.addf %3, %6 : vector<16x32xf32>
    %c0_6 = arith.constant 0 : index
    %c0_7 = arith.constant 0 : index
    %8 = vector.load %arg7[%c0_6, %c0_7] : memref<16x32xf32, #tpu.memory_space<vmem>>, vector<16x32xf32>
    tpu.vector_store %arg7[%c0_6, %c0_7], %7 {strides = array<i32>} : memref<16x32xf32, #tpu.memory_space<vmem>>, vector<16x32xf32>,
    %c0_i32_8 = arith.constant 0 : i32
    %9 = arith.cmpi eq, %arg2, %c0_i32_8 : i32
    %10 = arith.extui %9 : i1 to i32
    %c0_i32_9 = arith.constant 0 : i32
    %11 = arith.cmpi ne, %10, %c0_i32_9 : i32
    scf.if %11 {
      %c0_10 = arith.constant 0 : index
      %c0_11 = arith.constant 0 : index
      %12 = vector.load %arg7[%c0_10, %c0_11] : memref<16x32xf32, #tpu.memory_space<vmem>>, vector<16x32xf32>
      %c0_12 = arith.constant 0 : index
      %c0_13 = arith.constant 0 : index
      %13 = vector.load %arg5[%c0_12, %c0_13] : memref<1x32xf32, #tpu.memory_space<vmem>>, vector<1x32xf32>
      %14 = vector.broadcast %13 : vector<1x32xf32> to vector<16x32xf32>
      %15 = arith.addf %12, %14 : vector<16x32xf32>
      %c0_14 = arith.constant 0 : index
      %c0_15 = arith.constant 0 : index
      %16 = vector.load %arg6[%c0_14, %c0_15] : memref<16x32xf32, #tpu.memory_space<vmem>>, vector<16x32xf32>
      tpu.vector_store %arg6[%c0_14, %c0_15], %15 {strides = array<i32>} : memref<16x32xf32, #tpu.memory_space<vmem>>, vector<16x32xf32>,
    } else {
    }
    return
  }
  func.func @transform_0(%arg0: i32, %arg1: i32, %arg2: i32) -> (i32, i32) {
    %c0_i32 = arith.constant 0 : i32
    return %arg0, %arg2 : i32, i32
  }
  func.func @transform_1(%arg0: i32, %arg1: i32, %arg2: i32) -> (i32, i32) {
    %c0_i32 = arith.constant 0 : i32
    return %arg1, %arg2 : i32, i32
  }
  func.func @transform_2(%arg0: i32, %arg1: i32, %arg2: i32) -> (i32, i32) {
    %c0_i32 = arith.constant 0 : i32
    %c0_i32_0 = arith.constant 0 : i32
    return %c0_i32, %arg1 : i32, i32
  }
  func.func @transform_3(%arg0: i32, %arg1: i32, %arg2: i32) -> (i32, i32) {
    %c0_i32 = arith.constant 0 : i32
    return %arg0, %arg1 : i32, i32
  }
}

module attributes {stable_mosaic.version = 11 : i64} {
  func.func @_gqa_flash_kernel(%arg0: i32, %arg1: i32, %arg2: i32, %arg3: i32, %arg4: memref<1x8x1x2x8xf32, #tpu.memory_space<vmem>>, %arg5: memref<1x1x8x8xf32, #tpu.memory_space<vmem>>, %arg6: memref<1x1x8x8xf32, #tpu.memory_space<vmem>>, %arg7: memref<1x8x1x2x8xf32, #tpu.memory_space<vmem>>, %arg8: memref<16x1xf32, #tpu.memory_space<vmem>>, %arg9: memref<16x1xf32, #tpu.memory_space<vmem>>, %arg10: memref<16x8xf32, #tpu.memory_space<vmem>>) attributes {dimension_semantics = [#tpu.dimension_semantics<parallel>, #tpu.dimension_semantics<parallel>, #tpu.dimension_semantics<parallel>, #tpu.dimension_semantics<arbitrary>], iteration_bounds = array<i64: 2, 2, 1, 1>, scalar_prefetch = 0 : i64, scratch_operands = 3 : i64, tpu.core_type = #tpu.core_type<tc>, window_params = [{transform_indices = @transform_0, window_bounds = array<i64: 1, 8, 1, 2, 8>}, {transform_indices = @transform_1, window_bounds = array<i64: 1, 1, 8, 8>}, {transform_indices = @transform_2, window_bounds = array<i64: 1, 1, 8, 8>}, {transform_indices = @transform_3, window_bounds = array<i64: 1, 8, 1, 2, 8>}]} {
    %c0_i32 = arith.constant 0 : i32
    %0 = arith.cmpi eq, %arg3, %c0_i32 : i32
    %1 = arith.extui %0 : i1 to i32
    %c0_i32_0 = arith.constant 0 : i32
    %2 = arith.cmpi ne, %1, %c0_i32_0 : i32
    scf.if %2 {
      %cst_30 = arith.constant 0xFF800000 : f32
      %35 = vector.broadcast %cst_30 : f32 to vector<16x1xf32>
      %c0_31 = arith.constant 0 : index
      %c0_32 = arith.constant 0 : index
      %36 = vector.load %arg8[%c0_31, %c0_32] : memref<16x1xf32, #tpu.memory_space<vmem>>, vector<16x1xf32>
      tpu.vector_store %arg8[%c0_31, %c0_32], %35 {strides = array<i32>} : memref<16x1xf32, #tpu.memory_space<vmem>>, vector<16x1xf32>,
      %cst_33 = arith.constant 0.000000e+00 : f32
      %37 = vector.broadcast %cst_33 : f32 to vector<16x1xf32>
      %c0_34 = arith.constant 0 : index
      %c0_35 = arith.constant 0 : index
      %38 = vector.load %arg9[%c0_34, %c0_35] : memref<16x1xf32, #tpu.memory_space<vmem>>, vector<16x1xf32>
      tpu.vector_store %arg9[%c0_34, %c0_35], %37 {strides = array<i32>} : memref<16x1xf32, #tpu.memory_space<vmem>>, vector<16x1xf32>,
      %cst_36 = arith.constant 0.000000e+00 : f32
      %39 = vector.broadcast %cst_36 : f32 to vector<16x8xf32>
      %c0_37 = arith.constant 0 : index
      %c0_38 = arith.constant 0 : index
      %40 = vector.load %arg10[%c0_37, %c0_38] : memref<16x8xf32, #tpu.memory_space<vmem>>, vector<16x8xf32>
      tpu.vector_store %arg10[%c0_37, %c0_38], %39 {strides = array<i32>} : memref<16x8xf32, #tpu.memory_space<vmem>>, vector<16x8xf32>,
    } else {
    }
    %c0 = arith.constant 0 : index
    %c0_1 = arith.constant 0 : index
    %c0_2 = arith.constant 0 : index
    %c0_3 = arith.constant 0 : index
    %c0_4 = arith.constant 0 : index
    %3 = vector.load %arg4[%c0, %c0_1, %c0_2, %c0_3, %c0_4] : memref<1x8x1x2x8xf32, #tpu.memory_space<vmem>>, vector<1x8x1x2x8xf32>
    %4 = vector.shape_cast %3 : vector<1x8x1x2x8xf32> to vector<16x8xf32>
    %c0_5 = arith.constant 0 : index
    %c0_6 = arith.constant 0 : index
    %c0_7 = arith.constant 0 : index
    %c0_8 = arith.constant 0 : index
    %5 = vector.load %arg5[%c0_5, %c0_6, %c0_7, %c0_8] : memref<1x1x8x8xf32, #tpu.memory_space<vmem>>, vector<1x1x8x8xf32>
    %6 = vector.shape_cast %5 : vector<1x1x8x8xf32> to vector<8x8xf32>
    %c0_9 = arith.constant 0 : index
    %c0_10 = arith.constant 0 : index
    %c0_11 = arith.constant 0 : index
    %c0_12 = arith.constant 0 : index
    %7 = vector.load %arg6[%c0_9, %c0_10, %c0_11, %c0_12] : memref<1x1x8x8xf32, #tpu.memory_space<vmem>>, vector<1x1x8x8xf32>
    %8 = vector.shape_cast %7 : vector<1x1x8x8xf32> to vector<8x8xf32>
    %cst = arith.constant dense<0.000000e+00> : vector<16x8xf32>
    %9 = tpu.matmul %4, %6, %cst {dimension_numbers = #tpu.dot_dimension_numbers<[1], [1], [0], [0], [0, 0, 1, 0], [], []>} : vector<16x8xf32>, vector<8x8xf32>, vector<16x8xf32> -> vector<16x8xf32>
    %c0_13 = arith.constant 0 : index
    %c0_14 = arith.constant 0 : index
    %10 = vector.load %arg8[%c0_13, %c0_14] : memref<16x1xf32, #tpu.memory_space<vmem>>, vector<16x1xf32>
    %cst_15 = arith.constant dense<0xFF800000> : vector<16xf32>
    %11 = vector.multi_reduction <maximumf>, %9, %cst_15 [1] : vector<16x8xf32> to vector<16xf32>
    %12 = vector.shape_cast %11 : vector<16xf32> to vector<16x1xf32>
    %13 = arith.maximumf %10, %12 : vector<16x1xf32>
    %14 = arith.subf %10, %13 : vector<16x1xf32>
    %15 = math.exp %14 : vector<16x1xf32>
    %16 = vector.broadcast %13 : vector<16x1xf32> to vector<16x8xf32>
    %17 = arith.subf %9, %16 : vector<16x8xf32>
    %18 = math.exp %17 : vector<16x8xf32>
    %c0_16 = arith.constant 0 : index
    %c0_17 = arith.constant 0 : index
    %19 = vector.load %arg9[%c0_16, %c0_17] : memref<16x1xf32, #tpu.memory_space<vmem>>, vector<16x1xf32>
    %20 = arith.mulf %15, %19 : vector<16x1xf32>
    %cst_18 = arith.constant dense<0.000000e+00> : vector<16xf32>
    %21 = vector.multi_reduction <add>, %18, %cst_18 [1] : vector<16x8xf32> to vector<16xf32>
    %22 = vector.shape_cast %21 : vector<16xf32> to vector<16x1xf32>
    %23 = arith.addf %20, %22 : vector<16x1xf32>
    %c0_19 = arith.constant 0 : index
    %c0_20 = arith.constant 0 : index
    %24 = vector.load %arg9[%c0_19, %c0_20] : memref<16x1xf32, #tpu.memory_space<vmem>>, vector<16x1xf32>
    tpu.vector_store %arg9[%c0_19, %c0_20], %23 {strides = array<i32>} : memref<16x1xf32, #tpu.memory_space<vmem>>, vector<16x1xf32>,
    %c0_21 = arith.constant 0 : index
    %c0_22 = arith.constant 0 : index
    %25 = vector.load %arg10[%c0_21, %c0_22] : memref<16x8xf32, #tpu.memory_space<vmem>>, vector<16x8xf32>
    %26 = vector.broadcast %15 : vector<16x1xf32> to vector<16x8xf32>
    %27 = arith.mulf %26, %25 : vector<16x8xf32>
    %cst_23 = arith.constant dense<0.000000e+00> : vector<16x8xf32>
    %28 = tpu.matmul %18, %8, %cst_23 {dimension_numbers = #tpu.dot_dimension_numbers<[1], [0], [0], [1], [0, 0, 1, 1], [], []>} : vector<16x8xf32>, vector<8x8xf32>, vector<16x8xf32> -> vector<16x8xf32>
    %29 = arith.addf %27, %28 : vector<16x8xf32>
    %c0_24 = arith.constant 0 : index
    %c0_25 = arith.constant 0 : index
    %30 = vector.load %arg10[%c0_24, %c0_25] : memref<16x8xf32, #tpu.memory_space<vmem>>, vector<16x8xf32>
    tpu.vector_store %arg10[%c0_24, %c0_25], %29 {strides = array<i32>} : memref<16x8xf32, #tpu.memory_space<vmem>>, vector<16x8xf32>,
    %c0_26 = arith.constant 0 : index
    %c0_27 = arith.constant 0 : index
    %31 = vector.load %arg8[%c0_26, %c0_27] : memref<16x1xf32, #tpu.memory_space<vmem>>, vector<16x1xf32>
    tpu.vector_store %arg8[%c0_26, %c0_27], %13 {strides = array<i32>} : memref<16x1xf32, #tpu.memory_space<vmem>>, vector<16x1xf32>,
    %c0_i32_28 = arith.constant 0 : i32
    %32 = arith.cmpi eq, %arg3, %c0_i32_28 : i32
    %33 = arith.extui %32 : i1 to i32
    %c0_i32_29 = arith.constant 0 : i32
    %34 = arith.cmpi ne, %33, %c0_i32_29 : i32
    scf.if %34 {
      %c0_30 = arith.constant 0 : index
      %c0_31 = arith.constant 0 : index
      %35 = vector.load %arg9[%c0_30, %c0_31] : memref<16x1xf32, #tpu.memory_space<vmem>>, vector<16x1xf32>
      %36 = tpu.reciprocal %35 : vector<16x1xf32> -> vector<16x1xf32>
      %c0_32 = arith.constant 0 : index
      %c0_33 = arith.constant 0 : index
      %37 = vector.load %arg10[%c0_32, %c0_33] : memref<16x8xf32, #tpu.memory_space<vmem>>, vector<16x8xf32>
      %38 = vector.broadcast %36 : vector<16x1xf32> to vector<16x8xf32>
      %39 = arith.mulf %37, %38 : vector<16x8xf32>
      %40 = vector.shape_cast %39 : vector<16x8xf32> to vector<1x8x1x2x8xf32>
      %c0_34 = arith.constant 0 : index
      %c0_35 = arith.constant 0 : index
      %c0_36 = arith.constant 0 : index
      %c0_37 = arith.constant 0 : index
      %c0_38 = arith.constant 0 : index
      %41 = vector.load %arg7[%c0_34, %c0_35, %c0_36, %c0_37, %c0_38] : memref<1x8x1x2x8xf32, #tpu.memory_space<vmem>>, vector<1x8x1x2x8xf32>
      tpu.vector_store %arg7[%c0_34, %c0_35, %c0_36, %c0_37, %c0_38], %40 {strides = array<i32>} : memref<1x8x1x2x8xf32, #tpu.memory_space<vmem>>, vector<1x8x1x2x8xf32>,
    } else {
    }
    return
  }
  func.func @transform_0(%arg0: i32, %arg1: i32, %arg2: i32, %arg3: i32) -> (i32, i32, i32, i32, i32) {
    %c0_i32 = arith.constant 0 : i32
    %c0_i32_0 = arith.constant 0 : i32
    %c0_i32_1 = arith.constant 0 : i32
    return %arg0, %arg2, %arg1, %c0_i32, %c0_i32_0 : i32, i32, i32, i32, i32
  }
  func.func @transform_1(%arg0: i32, %arg1: i32, %arg2: i32, %arg3: i32) -> (i32, i32, i32, i32) {
    %c0_i32 = arith.constant 0 : i32
    %c0_i32_0 = arith.constant 0 : i32
    return %arg0, %arg1, %arg3, %c0_i32 : i32, i32, i32, i32
  }
  func.func @transform_2(%arg0: i32, %arg1: i32, %arg2: i32, %arg3: i32) -> (i32, i32, i32, i32) {
    %c0_i32 = arith.constant 0 : i32
    %c0_i32_0 = arith.constant 0 : i32
    return %arg0, %arg1, %arg3, %c0_i32 : i32, i32, i32, i32
  }
  func.func @transform_3(%arg0: i32, %arg1: i32, %arg2: i32, %arg3: i32) -> (i32, i32, i32, i32, i32) {
    %c0_i32 = arith.constant 0 : i32
    %c0_i32_0 = arith.constant 0 : i32
    %c0_i32_1 = arith.constant 0 : i32
    return %arg0, %arg2, %arg1, %c0_i32, %c0_i32_0 : i32, i32, i32, i32, i32
  }
}

</mosaic_0001>

<llo_original>
// kernel: gqa_forward.4
$region0: #{gqa_forward.4}
  #allocation0 [shape = 'u32[]', space=smem, size = 0x4, offset = 0x4, fixed_abs, tag = 'smem constant byte address 0x4 - core index']
  #allocation1 [shape = 'u32[144,128]{1,0:T(1,128)}', space=vmem, size = 0x12000, scoped, tag = 'internal scratch']
  #allocation2 [shape = 'f32[16,32]{1,0:T(8,128)}', space=vmem, size = 0x2000, scoped, tag = 'scratch operand']
  %s0 = inlined_call_operand.vmem [shape: f32[16,32], index: 0, kind: input, shape index: {}]
  %s1 = inlined_call_operand.vmem [shape: f32[32,32], index: 1, kind: input, shape index: {}]
  %s2 = inlined_call_operand.vmem [shape: f32[1,32], index: 2, kind: input, shape index: {}]
  %s3 = inlined_call_operand.vmem [shape: f32[16,32], index: 3, kind: output, shape index: {}]
  %s4 = sld [smem:[#allocation0]]
  $region30: #{gqa_forward.4} parent=0
    _
  %s6 = ssub.s32 1, %s4
  %s7 = scalar_select 0, %s6, %s4
  // Predicated region
  $region2: #{gqa_forward.4} parent=0 // pred_check
    _
  $region3: #{gqa_forward.4} parent=0 // pred_check_branch
    %9 = sbr.rel (0) target = $region5
  $region4: #{gqa_forward.4} parent=0 // pred_region
    _
  $region5: #{gqa_forward.4} parent=0 // pred_fallthru
    _
  // Predicated region
  $region6: #{gqa_forward.4} parent=0 // pred_check
    _
  $region7: #{gqa_forward.4} parent=0 // pred_check_branch
    %11 = sbr.rel (0) target = $region9
  $region8: #{gqa_forward.4} parent=0 // pred_region
    _
  $region9: #{gqa_forward.4} parent=0 // pred_fallthru
    _
  // Predicated region
  $region10: #{gqa_forward.4} parent=0 // pred_check
    _
  $region11: #{gqa_forward.4} parent=0 // pred_check_branch
    %13 = sbr.rel (0) target = $region13
  $region12: #{gqa_forward.4} parent=0 // pred_region
    _
  $region13: #{gqa_forward.4} parent=0 // pred_fallthru
    _
  %p14 = scmp.eq.s32.totalorder 0, 0
  // Predicated region
  $region14: #{gqa_forward.4} parent=0 // pred_check
    %p15 = pneg %p14
  $region15: #{gqa_forward.4} parent=0 // pred_check_branch
    %17 = sbr.rel (%p15) target = $region17
  $region16: #{gqa_forward.4} parent=0 // pred_region
    %vm18 = vcmask 261120
    %19 = vst.msk [vmem:[#allocation2] sm:$0xff] %vm18, 0.0
    %20 = vst.msk [vmem:[#allocation2 + $0x8] sm:$0xff] %vm18, 0.0
  $region17: #{gqa_forward.4} parent=0 // pred_fallthru
    _
  %v21 = vld [vmem:[#allocation2] sm:$0xff]
  %v22 = vld [vmem:[#allocation2 + $0x8] sm:$0xff]
  %v23 = vld [vmem:[%s0] sm:$0xff]
  %v24 = vld [vmem:[%s0 + $0x8] sm:$0xff]
  %v25 = vld [vmem:[%s1] sm:$0xff]
  %v26 = vld [vmem:[%s1 + $0x8] sm:$0xff]
  %v27 = vld [vmem:[%s1 + $0x10] sm:$0xff]
  %v28 = vld [vmem:[%s1 + $0x18] sm:$0xff]
  %vm29 = vcmask 261120
  %v31 = vsel %vm29, %v23, 0
  %v34 = vsel %vm29, %v24, 0
  %v37 = vsel %vm29, %v25, 0
  %v40 = vsel %vm29, %v26, 0
  %v43 = vsel %vm29, %v27, 0
  %v46 = vsel %vm29, %v28, 0
  %48 = vmatprep.subr.mxu0 0.0
  %49 = vmatpush1.xpose.msra.mxu0 %v37
  %50 = vmatprep.subr.mxu0 0.0
  %51 = vmatpush1.xpose.msra.mxu0 %v40
  %52 = vmatprep.subr.mxu0 0.0
  %53 = vmatpush1.xpose.msra.mxu0 %v43
  %54 = vmatprep.subr.mxu0 0.0
  %55 = vmatpush1.xpose.msra.mxu0 %v46
  %56 = vmatprep.subr.mxu0 0.0
  %57 = vmatpush1.xpose.msra.mxu0 0.0
  %58 = vmatprep.subr.mxu0 0.0
  %59 = vmatpush1.xpose.msra.mxu0 0.0
  %60 = vmatprep.subr.mxu0 0.0
  %61 = vmatpush1.xpose.msra.mxu0 0.0
  %62 = vmatprep.subr.mxu0 0.0
  %63 = vmatpush1.xpose.msra.mxu0 0.0
  %64 = vmatprep.subr.mxu0 0.0
  %65 = vmatpush1.xpose.msra.mxu0 0.0
  %66 = vmatprep.subr.mxu0 0.0
  %67 = vmatpush1.xpose.msra.mxu0 0.0
  %68 = vmatprep.subr.mxu0 0.0
  %69 = vmatpush1.xpose.msra.mxu0 0.0
  %70 = vmatprep.subr.mxu0 0.0
  %71 = vmatpush1.xpose.msra.mxu0 0.0
  %72 = vmatprep.subr.mxu0 0.0
  %73 = vmatpush1.xpose.msra.mxu0 0.0
  %74 = vmatprep.subr.mxu0 0.0
  %75 = vmatpush1.xpose.msra.mxu0 0.0
  %76 = vmatprep.subr.mxu0 0.0
  %77 = vmatpush1.xpose.msra.mxu0 0.0
  %78 = vmatprep.subr.mxu0 0.0
  %79 = vmatpush1.xpose.msra.mxu0 0.0
  %80 = vmatprep.subr.mxu0 0.0
  %81 = vmatpush1.xpose.msra.mxu0 0.0
  %82 = vmatprep.subr.mxu0 0.0
  %83 = vmatpush1.xpose.msra.mxu0 0.0
  %84 = vmatprep.subr.mxu0 0.0
  %85 = vmatpush1.xpose.msra.mxu0 0.0
  %86 = vmatprep.subr.mxu0 0.0
  %87 = vmatpush1.xpose.msra.mxu0 0.0
  %88 = vmatprep.subr.mxu0 0.0
  %89 = vmatpush1.xpose.msra.mxu0 0.0
  %90 = vmatprep.subr.mxu0 0.0
  %91 = vmatpush1.xpose.msra.mxu0 0.0
  %92 = vmatprep.subr.mxu0 0.0
  %93 = vmatpush1.xpose.msra.mxu0 0.0
  %94 = vmatprep.subr.mxu0 0.0
  %95 = vmatpush1.xpose.msra.mxu0 0.0
  %96 = vmatprep.subr.mxu0 0.0
  %97 = vmatpush1.xpose.msra.mxu0 0.0
  %98 = vmatprep.subr.mxu0 0.0
  %99 = vmatpush1.xpose.msra.mxu0 0.0
  %100 = vmatprep.subr.mxu0 0.0
  %101 = vmatpush1.xpose.msra.mxu0 0.0
  %102 = vmatprep.subr.mxu0 0.0
  %103 = vmatpush1.xpose.msra.mxu0 0.0
  %104 = vmatprep.subr.mxu0 0.0
  %105 = vmatpush1.xpose.msra.mxu0 0.0
  %106 = vmatprep.subr.mxu0 0.0
  %107 = vmatpush1.xpose.msra.mxu0 0.0
  %108 = vmatprep.subr.mxu0 0.0
  %109 = vmatpush1.xpose.msra.mxu0 0.0
  %110 = vmatprep.subr.mxu0 0.0
  %111 = vmatpush1.xpose.msra.mxu0 0.0
  %112 = vmatprep.mubr.f32.mxu0 0.0
  %113 = vmatmul.mubr.f32.gmra.mrb[0].mxu0 %v31
  %v114 = vpop.f32.mrb[0].mxu0
  %v115 = vadd.f32 0.0, %v114
  %v116 = vpop.f32.mrb[0].mxu0
  %117 = vmatprep.mubr.f32.mxu0 0.0
  %118 = vmatmul.mubr.f32.gmra.mrb[0].mxu0 %v34
  %v119 = vpop.f32.mrb[0].mxu0
  %v120 = vadd.f32 0.0, %v119
  %v121 = vpop.f32.mrb[0].mxu0
  %122 = vdwg.mxu0
  %v123 = vadd.f32 %v21, %v115
  %v124 = vadd.f32 %v22, %v120
  %125 = vst.msk [vmem:[#allocation2] sm:$0xff] %vm29, %v123
  %126 = vst.msk [vmem:[#allocation2 + $0x8] sm:$0xff] %vm29, %v124
  // Predicated region
  $region18: #{gqa_forward.4} parent=0 // pred_check
    %p127 = pneg %p14
  $region19: #{gqa_forward.4} parent=0 // pred_check_branch
    %129 = sbr.rel (%p127) target = $region21
  $region20: #{gqa_forward.4} parent=0 // pred_region
    %v130 = vld [vmem:[#allocation2] sm:$0xff]
    %v131 = vld [vmem:[#allocation2 + $0x8] sm:$0xff]
    %v132 = vld [vmem:[%s2] sm:$0x1]
    %v134 = vlaneseq
    %v135 = vshrl.u32 %v134, 7
    %v136 = vsub.s32 0, %v135
    %v137 = vrot.slane %v132, %v136
    %v139 = vadd.f32 %v130, %v137
    %v140 = vadd.f32 %v131, %v137
    %141 = vst.msk [vmem:[%s3] sm:$0xff] %vm29, %v139
    %142 = vst.msk [vmem:[%s3 + $0x8] sm:$0xff] %vm29, %v140
  $region21: #{gqa_forward.4} parent=0 // pred_fallthru
    _
  // Predicated region
  $region22: #{gqa_forward.4} parent=0 // pred_check
    _
  $region23: #{gqa_forward.4} parent=0 // pred_check_branch
    %144 = sbr.rel (0) target = $region25
  $region24: #{gqa_forward.4} parent=0 // pred_region
    _
  $region25: #{gqa_forward.4} parent=0 // pred_fallthru
    _
  // Predicated region
  $region26: #{gqa_forward.4} parent=0 // pred_check
    _
  $region27: #{gqa_forward.4} parent=0 // pred_check_branch
    %146 = sbr.rel (0) target = $region29
  $region28: #{gqa_forward.4} parent=0 // pred_region
    _
  $region29: #{gqa_forward.4} parent=0 // pred_fallthru
    _

// kernel: gqa_forward.5
$region0: #{gqa_forward.5}
  #allocation0 [shape = 'u32[]', space=smem, size = 0x4, offset = 0x4, fixed_abs, tag = 'smem constant byte address 0x4 - core index']
  #allocation1 [shape = 'u32[144,128]{1,0:T(1,128)}', space=vmem, size = 0x12000, scoped, tag = 'internal scratch']
  #allocation2 [shape = 'f32[16,32]{1,0:T(8,128)}', space=vmem, size = 0x2000, scoped, tag = 'scratch operand']
  %s0 = inlined_call_operand.hbm [shape: f32[16,32], index: 0, kind: input, shape index: {}]
  %s1 = inlined_call_operand.hbm [shape: f32[32,32], index: 1, kind: input, shape index: {}]
  %s2 = inlined_call_operand.vmem [shape: f32[1,32], index: 2, kind: input, shape index: {}]
  %s3 = inlined_call_operand.vmem [shape: f32[16,32], index: 3, kind: output, shape index: {}]
  %s4 = sld [smem:[#allocation0]]
  $region38: #{gqa_forward.5} parent=0
    _
  %s6 = ssub.s32 1, %s4
  %s7 = scalar_select 0, %s6, %s4
  $region1: #{gqa_forward.5} parent=0
    #allocation3 [shape = 'u8[8192]{0}', space=vmem, size = 0x2000, scoped, tag = 'input window, operand 0, single buffered']
    #allocation4 [shape = 's32[1]{0}', space=sflag, size = 0x4, scoped, tag = 'scoped memory for gqa_forward.5']
    #allocation5 [shape = 'u8[16384]{0}', space=vmem, size = 0x4000, scoped, tag = 'input window, operand 1, single buffered']
    #allocation6 [shape = 's32[1]{0}', space=sflag, size = 0x4, scoped, tag = 'scoped memory for gqa_forward.5']
    %8 = vsyncpa [#allocation4], 0
    %9 = vsyncpa [#allocation6], 0
    // Predicated region
    $region2: #{gqa_forward.5} parent=1 // pred_check
      _
    $region3: #{gqa_forward.5} parent=1 // pred_check_branch
      %11 = sbr.rel (0) target = $region5
    $region4: #{gqa_forward.5} parent=1 // pred_region
      %s13 = ssub.s32 256, 256
      %14 = vsyncadd [#allocation4], %s13
      %s15 = sshll.u32 [#allocation3], 4
      %s16 = int_to_ptr.vmem [resolvable:$true] %s15
      %21 = dma.hbm_to_vmem [thread:$0]  %s0, 256, %s16, [#allocation4], 128, 128, 8
    $region5: #{gqa_forward.5} parent=1 // pred_fallthru
      _
    // Predicated region
    $region6: #{gqa_forward.5} parent=1 // pred_check
      _
    $region7: #{gqa_forward.5} parent=1 // pred_check_branch
      %23 = sbr.rel (0) target = $region9
    $region8: #{gqa_forward.5} parent=1 // pred_region
      %s25 = ssub.s32 512, 512
      %26 = vsyncadd [#allocation6], %s25
      %s27 = sshll.u32 [#allocation5], 4
      %s28 = int_to_ptr.vmem [resolvable:$true] %s27
      %33 = dma.hbm_to_vmem [thread:$0]  %s1, 512, %s28, [#allocation6], 128, 128, 8
    $region9: #{gqa_forward.5} parent=1 // pred_fallthru
      _
    // Predicated region
    $region10: #{gqa_forward.5} parent=1 // pred_check
      _
    $region11: #{gqa_forward.5} parent=1 // pred_check_branch
      %35 = sbr.rel (0) target = $region13
    $region12: #{gqa_forward.5} parent=1 // pred_region
      _
    $region13: #{gqa_forward.5} parent=1 // pred_fallthru
      _
    // Predicated region
    $region14: #{gqa_forward.5} parent=1 // pred_check
      _
    $region15: #{gqa_forward.5} parent=1 // pred_check_branch
      %37 = sbr.rel (0) target = $region17
    $region16: #{gqa_forward.5} parent=1 // pred_region
      %38 = dma.done [#allocation4], 256
    $region17: #{gqa_forward.5} parent=1 // pred_fallthru
      _
    // Predicated region
    $region18: #{gqa_forward.5} parent=1 // pred_check
      _
    $region19: #{gqa_forward.5} parent=1 // pred_check_branch
      %40 = sbr.rel (0) target = $region21
    $region20: #{gqa_forward.5} parent=1 // pred_region
      %41 = dma.done [#allocation6], 512
    $region21: #{gqa_forward.5} parent=1 // pred_fallthru
      _
    %p42 = scmp.eq.s32.totalorder 0, 0
    // Predicated region
    $region22: #{gqa_forward.5} parent=1 // pred_check
      %p43 = pneg %p42
    $region23: #{gqa_forward.5} parent=1 // pred_check_branch
      %45 = sbr.rel (%p43) target = $region25
    $region24: #{gqa_forward.5} parent=1 // pred_region
      %vm46 = vcmask 261120
      %47 = vst.msk [vmem:[#allocation2] sm:$0xff] %vm46, 0.0
      %48 = vst.msk [vmem:[#allocation2 + $0x8] sm:$0xff] %vm46, 0.0
    $region25: #{gqa_forward.5} parent=1 // pred_fallthru
      _
    %v49 = vld [vmem:[#allocation2] sm:$0xff]
    %v50 = vld [vmem:[#allocation2 + $0x8] sm:$0xff]
    %v51 = vld [vmem:[#allocation3] sm:$0xff]
    %v52 = vld [vmem:[#allocation3 + $0x8] sm:$0xff]
    %v53 = vld [vmem:[#allocation5] sm:$0xff]
    %v54 = vld [vmem:[#allocation5 + $0x8] sm:$0xff]
    %v55 = vld [vmem:[#allocation5 + $0x10] sm:$0xff]
    %v56 = vld [vmem:[#allocation5 + $0x18] sm:$0xff]
    %vm57 = vcmask 261120
    %v59 = vsel %vm57, %v51, 0
    %v62 = vsel %vm57, %v52, 0
    %v65 = vsel %vm57, %v53, 0
    %v68 = vsel %vm57, %v54, 0
    %v71 = vsel %vm57, %v55, 0
    %v74 = vsel %vm57, %v56, 0
    %76 = vmatprep.subr.mxu0 0.0
    %77 = vmatpush1.xpose.msra.mxu0 %v65
    %78 = vmatprep.subr.mxu0 0.0
    %79 = vmatpush1.xpose.msra.mxu0 %v68
    %80 = vmatprep.subr.mxu0 0.0
    %81 = vmatpush1.xpose.msra.mxu0 %v71
    %82 = vmatprep.subr.mxu0 0.0
    %83 = vmatpush1.xpose.msra.mxu0 %v74
    %84 = vmatprep.subr.mxu0 0.0
    %85 = vmatpush1.xpose.msra.mxu0 0.0
    %86 = vmatprep.subr.mxu0 0.0
    %87 = vmatpush1.xpose.msra.mxu0 0.0
    %88 = vmatprep.subr.mxu0 0.0
    %89 = vmatpush1.xpose.msra.mxu0 0.0
    %90 = vmatprep.subr.mxu0 0.0
    %91 = vmatpush1.xpose.msra.mxu0 0.0
    %92 = vmatprep.subr.mxu0 0.0
    %93 = vmatpush1.xpose.msra.mxu0 0.0
    %94 = vmatprep.subr.mxu0 0.0
    %95 = vmatpush1.xpose.msra.mxu0 0.0
    %96 = vmatprep.subr.mxu0 0.0
    %97 = vmatpush1.xpose.msra.mxu0 0.0
    %98 = vmatprep.subr.mxu0 0.0
    %99 = vmatpush1.xpose.msra.mxu0 0.0
    %100 = vmatprep.subr.mxu0 0.0
    %101 = vmatpush1.xpose.msra.mxu0 0.0
    %102 = vmatprep.subr.mxu0 0.0
    %103 = vmatpush1.xpose.msra.mxu0 0.0
    %104 = vmatprep.subr.mxu0 0.0
    %105 = vmatpush1.xpose.msra.mxu0 0.0
    %106 = vmatprep.subr.mxu0 0.0
    %107 = vmatpush1.xpose.msra.mxu0 0.0
    %108 = vmatprep.subr.mxu0 0.0
    %109 = vmatpush1.xpose.msra.mxu0 0.0
    %110 = vmatprep.subr.mxu0 0.0
    %111 = vmatpush1.xpose.msra.mxu0 0.0
    %112 = vmatprep.subr.mxu0 0.0
    %113 = vmatpush1.xpose.msra.mxu0 0.0
    %114 = vmatprep.subr.mxu0 0.0
    %115 = vmatpush1.xpose.msra.mxu0 0.0
    %116 = vmatprep.subr.mxu0 0.0
    %117 = vmatpush1.xpose.msra.mxu0 0.0
    %118 = vmatprep.subr.mxu0 0.0
    %119 = vmatpush1.xpose.msra.mxu0 0.0
    %120 = vmatprep.subr.mxu0 0.0
    %121 = vmatpush1.xpose.msra.mxu0 0.0
    %122 = vmatprep.subr.mxu0 0.0
    %123 = vmatpush1.xpose.msra.mxu0 0.0
    %124 = vmatprep.subr.mxu0 0.0
    %125 = vmatpush1.xpose.msra.mxu0 0.0
    %126 = vmatprep.subr.mxu0 0.0
    %127 = vmatpush1.xpose.msra.mxu0 0.0
    %128 = vmatprep.subr.mxu0 0.0
    %129 = vmatpush1.xpose.msra.mxu0 0.0
    %130 = vmatprep.subr.mxu0 0.0
    %131 = vmatpush1.xpose.msra.mxu0 0.0
    %132 = vmatprep.subr.mxu0 0.0
    %133 = vmatpush1.xpose.msra.mxu0 0.0
    %134 = vmatprep.subr.mxu0 0.0
    %135 = vmatpush1.xpose.msra.mxu0 0.0
    %136 = vmatprep.subr.mxu0 0.0
    %137 = vmatpush1.xpose.msra.mxu0 0.0
    %138 = vmatprep.subr.mxu0 0.0
    %139 = vmatpush1.xpose.msra.mxu0 0.0
    %140 = vmatprep.mubr.f32.mxu0 0.0
    %141 = vmatmul.mubr.f32.gmra.mrb[0].mxu0 %v59
    %v142 = vpop.f32.mrb[0].mxu0
    %v143 = vadd.f32 0.0, %v142
    %v144 = vpop.f32.mrb[0].mxu0
    %145 = vmatprep.mubr.f32.mxu0 0.0
    %146 = vmatmul.mubr.f32.gmra.mrb[0].mxu0 %v62
    %v147 = vpop.f32.mrb[0].mxu0
    %v148 = vadd.f32 0.0, %v147
    %v149 = vpop.f32.mrb[0].mxu0
    %150 = vdwg.mxu0
    %v151 = vadd.f32 %v49, %v143
    %v152 = vadd.f32 %v50, %v148
    %153 = vst.msk [vmem:[#allocation2] sm:$0xff] %vm57, %v151
    %154 = vst.msk [vmem:[#allocation2 + $0x8] sm:$0xff] %vm57, %v152
    // Predicated region
    $region26: #{gqa_forward.5} parent=1 // pred_check
      %p155 = pneg %p42
    $region27: #{gqa_forward.5} parent=1 // pred_check_branch
      %157 = sbr.rel (%p155) target = $region29
    $region28: #{gqa_forward.5} parent=1 // pred_region
      %v158 = vld [vmem:[#allocation2] sm:$0xff]
      %v159 = vld [vmem:[#allocation2 + $0x8] sm:$0xff]
      %v160 = vld [vmem:[%s2] sm:$0x1]
      %v162 = vlaneseq
      %v163 = vshrl.u32 %v162, 7
      %v164 = vsub.s32 0, %v163
      %v165 = vrot.slane %v160, %v164
      %v167 = vadd.f32 %v158, %v165
      %v168 = vadd.f32 %v159, %v165
      %169 = vst.msk [vmem:[%s3] sm:$0xff] %vm57, %v167
      %170 = vst.msk [vmem:[%s3 + $0x8] sm:$0xff] %vm57, %v168
    $region29: #{gqa_forward.5} parent=1 // pred_fallthru
      _
    // Predicated region
    $region30: #{gqa_forward.5} parent=1 // pred_check
      _
    $region31: #{gqa_forward.5} parent=1 // pred_check_branch
      %172 = sbr.rel (0) target = $region33
    $region32: #{gqa_forward.5} parent=1 // pred_region
      _
    $region33: #{gqa_forward.5} parent=1 // pred_fallthru
      _
    // Predicated region
    $region34: #{gqa_forward.5} parent=1 // pred_check
      _
    $region35: #{gqa_forward.5} parent=1 // pred_check_branch
      %174 = sbr.rel (0) target = $region37
    $region36: #{gqa_forward.5} parent=1 // pred_region
      _
    $region37: #{gqa_forward.5} parent=1 // pred_fallthru
      _
    %175 = vsyncpa [#allocation4], 1
    %176 = vsyncpa [#allocation6], 1

// kernel: gqa_forward.7
$region0: #{gqa_forward.7}
  #allocation0 [shape = 'u32[]', space=smem, size = 0x4, offset = 0x4, fixed_abs, tag = 'smem constant byte address 0x4 - core index']
  #allocation1 [shape = 'u32[144,128]{1,0:T(1,128)}', space=vmem, size = 0x12000, scoped, tag = 'internal scratch']
  #allocation2 [shape = 'f32[16,32]{1,0:T(8,128)}', space=vmem, size = 0x2000, scoped, tag = 'scratch operand']
  %s0 = inlined_call_operand.vmem [shape: f32[16,32], index: 0, kind: input, shape index: {}]
  %s1 = inlined_call_operand.vmem [shape: f32[32,32], index: 1, kind: input, shape index: {}]
  %s2 = inlined_call_operand.vmem [shape: f32[1,32], index: 2, kind: input, shape index: {}]
  %s3 = inlined_call_operand.hbm [shape: f32[16,32], index: 3, kind: output, shape index: {}]
  %s4 = sld [smem:[#allocation0]]
  $region30: #{gqa_forward.7} parent=0
    _
  %s6 = ssub.s32 1, %s4
  %s7 = scalar_select 0, %s6, %s4
  $region1: #{gqa_forward.7} parent=0
    #allocation3 [shape = 'u8[8192]{0}', space=vmem, size = 0x2000, scoped, tag = 'output window, operand 0, single buffered']
    #allocation4 [shape = 's32[1]{0}', space=sflag, size = 0x4, scoped, tag = 'scoped memory for gqa_forward.7']
    %8 = vsyncpa [#allocation4], 0
    // Predicated region
    $region2: #{gqa_forward.7} parent=1 // pred_check
      _
    $region3: #{gqa_forward.7} parent=1 // pred_check_branch
      %10 = sbr.rel (0) target = $region5
    $region4: #{gqa_forward.7} parent=1 // pred_region
      _
    $region5: #{gqa_forward.7} parent=1 // pred_fallthru
      _
    // Predicated region
    $region6: #{gqa_forward.7} parent=1 // pred_check
      _
    $region7: #{gqa_forward.7} parent=1 // pred_check_branch
      %12 = sbr.rel (0) target = $region9
    $region8: #{gqa_forward.7} parent=1 // pred_region
      _
    $region9: #{gqa_forward.7} parent=1 // pred_fallthru
      _
    // Predicated region
    $region10: #{gqa_forward.7} parent=1 // pred_check
      _
    $region11: #{gqa_forward.7} parent=1 // pred_check_branch
      %14 = sbr.rel (0) target = $region13
    $region12: #{gqa_forward.7} parent=1 // pred_region
      _
    $region13: #{gqa_forward.7} parent=1 // pred_fallthru
      _
    %p15 = scmp.eq.s32.totalorder 0, 0
    // Predicated region
    $region14: #{gqa_forward.7} parent=1 // pred_check
      %p16 = pneg %p15
    $region15: #{gqa_forward.7} parent=1 // pred_check_branch
      %18 = sbr.rel (%p16) target = $region17
    $region16: #{gqa_forward.7} parent=1 // pred_region
      %vm19 = vcmask 261120
      %20 = vst.msk [vmem:[#allocation2] sm:$0xff] %vm19, 0.0
      %21 = vst.msk [vmem:[#allocation2 + $0x8] sm:$0xff] %vm19, 0.0
    $region17: #{gqa_forward.7} parent=1 // pred_fallthru
      _
    %v22 = vld [vmem:[#allocation2] sm:$0xff]
    %v23 = vld [vmem:[#allocation2 + $0x8] sm:$0xff]
    %v24 = vld [vmem:[%s0] sm:$0xff]
    %v25 = vld [vmem:[%s0 + $0x8] sm:$0xff]
    %v26 = vld [vmem:[%s1] sm:$0xff]
    %v27 = vld [vmem:[%s1 + $0x8] sm:$0xff]
    %v28 = vld [vmem:[%s1 + $0x10] sm:$0xff]
    %v29 = vld [vmem:[%s1 + $0x18] sm:$0xff]
    %vm30 = vcmask 261120
    %v32 = vsel %vm30, %v24, 0
    %v35 = vsel %vm30, %v25, 0
    %v38 = vsel %vm30, %v26, 0
    %v41 = vsel %vm30, %v27, 0
    %v44 = vsel %vm30, %v28, 0
    %v47 = vsel %vm30, %v29, 0
    %49 = vmatprep.subr.mxu0 0.0
    %50 = vmatpush1.xpose.msra.mxu0 %v38
    %51 = vmatprep.subr.mxu0 0.0
    %52 = vmatpush1.xpose.msra.mxu0 %v41
    %53 = vmatprep.subr.mxu0 0.0
    %54 = vmatpush1.xpose.msra.mxu0 %v44
    %55 = vmatprep.subr.mxu0 0.0
    %56 = vmatpush1.xpose.msra.mxu0 %v47
    %57 = vmatprep.subr.mxu0 0.0
    %58 = vmatpush1.xpose.msra.mxu0 0.0
    %59 = vmatprep.subr.mxu0 0.0
    %60 = vmatpush1.xpose.msra.mxu0 0.0
    %61 = vmatprep.subr.mxu0 0.0
    %62 = vmatpush1.xpose.msra.mxu0 0.0
    %63 = vmatprep.subr.mxu0 0.0
    %64 = vmatpush1.xpose.msra.mxu0 0.0
    %65 = vmatprep.subr.mxu0 0.0
    %66 = vmatpush1.xpose.msra.mxu0 0.0
    %67 = vmatprep.subr.mxu0 0.0
    %68 = vmatpush1.xpose.msra.mxu0 0.0
    %69 = vmatprep.subr.mxu0 0.0
    %70 = vmatpush1.xpose.msra.mxu0 0.0
    %71 = vmatprep.subr.mxu0 0.0
    %72 = vmatpush1.xpose.msra.mxu0 0.0
    %73 = vmatprep.subr.mxu0 0.0
    %74 = vmatpush1.xpose.msra.mxu0 0.0
    %75 = vmatprep.subr.mxu0 0.0
    %76 = vmatpush1.xpose.msra.mxu0 0.0
    %77 = vmatprep.subr.mxu0 0.0
    %78 = vmatpush1.xpose.msra.mxu0 0.0
    %79 = vmatprep.subr.mxu0 0.0
    %80 = vmatpush1.xpose.msra.mxu0 0.0
    %81 = vmatprep.subr.mxu0 0.0
    %82 = vmatpush1.xpose.msra.mxu0 0.0
    %83 = vmatprep.subr.mxu0 0.0
    %84 = vmatpush1.xpose.msra.mxu0 0.0
    %85 = vmatprep.subr.mxu0 0.0
    %86 = vmatpush1.xpose.msra.mxu0 0.0
    %87 = vmatprep.subr.mxu0 0.0
    %88 = vmatpush1.xpose.msra.mxu0 0.0
    %89 = vmatprep.subr.mxu0 0.0
    %90 = vmatpush1.xpose.msra.mxu0 0.0
    %91 = vmatprep.subr.mxu0 0.0
    %92 = vmatpush1.xpose.msra.mxu0 0.0
    %93 = vmatprep.subr.mxu0 0.0
    %94 = vmatpush1.xpose.msra.mxu0 0.0
    %95 = vmatprep.subr.mxu0 0.0
    %96 = vmatpush1.xpose.msra.mxu0 0.0
    %97 = vmatprep.subr.mxu0 0.0
    %98 = vmatpush1.xpose.msra.mxu0 0.0
    %99 = vmatprep.subr.mxu0 0.0
    %100 = vmatpush1.xpose.msra.mxu0 0.0
    %101 = vmatprep.subr.mxu0 0.0
    %102 = vmatpush1.xpose.msra.mxu0 0.0
    %103 = vmatprep.subr.mxu0 0.0
    %104 = vmatpush1.xpose.msra.mxu0 0.0
    %105 = vmatprep.subr.mxu0 0.0
    %106 = vmatpush1.xpose.msra.mxu0 0.0
    %107 = vmatprep.subr.mxu0 0.0
    %108 = vmatpush1.xpose.msra.mxu0 0.0
    %109 = vmatprep.subr.mxu0 0.0
    %110 = vmatpush1.xpose.msra.mxu0 0.0
    %111 = vmatprep.subr.mxu0 0.0
    %112 = vmatpush1.xpose.msra.mxu0 0.0
    %113 = vmatprep.mubr.f32.mxu0 0.0
    %114 = vmatmul.mubr.f32.gmra.mrb[0].mxu0 %v32
    %v115 = vpop.f32.mrb[0].mxu0
    %v116 = vadd.f32 0.0, %v115
    %v117 = vpop.f32.mrb[0].mxu0
    %118 = vmatprep.mubr.f32.mxu0 0.0
    %119 = vmatmul.mubr.f32.gmra.mrb[0].mxu0 %v35
    %v120 = vpop.f32.mrb[0].mxu0
    %v121 = vadd.f32 0.0, %v120
    %v122 = vpop.f32.mrb[0].mxu0
    %123 = vdwg.mxu0
    %v124 = vadd.f32 %v22, %v116
    %v125 = vadd.f32 %v23, %v121
    %126 = vst.msk [vmem:[#allocation2] sm:$0xff] %vm30, %v124
    %127 = vst.msk [vmem:[#allocation2 + $0x8] sm:$0xff] %vm30, %v125
    // Predicated region
    $region18: #{gqa_forward.7} parent=1 // pred_check
      %p128 = pneg %p15
    $region19: #{gqa_forward.7} parent=1 // pred_check_branch
      %130 = sbr.rel (%p128) target = $region21
    $region20: #{gqa_forward.7} parent=1 // pred_region
      %v131 = vld [vmem:[#allocation2] sm:$0xff]
      %v132 = vld [vmem:[#allocation2 + $0x8] sm:$0xff]
      %v133 = vld [vmem:[%s2] sm:$0x1]
      %v135 = vlaneseq
      %v136 = vshrl.u32 %v135, 7
      %v137 = vsub.s32 0, %v136
      %v138 = vrot.slane %v133, %v137
      %v140 = vadd.f32 %v131, %v138
      %v141 = vadd.f32 %v132, %v138
      %142 = vst.msk [vmem:[#allocation3] sm:$0xff] %vm30, %v140
      %143 = vst.msk [vmem:[#allocation3 + $0x8] sm:$0xff] %vm30, %v141
    $region21: #{gqa_forward.7} parent=1 // pred_fallthru
      _
    // Predicated region
    $region22: #{gqa_forward.7} parent=1 // pred_check
      _
    $region23: #{gqa_forward.7} parent=1 // pred_check_branch
      %145 = sbr.rel (0) target = $region25
    $region24: #{gqa_forward.7} parent=1 // pred_region
      %s147 = ssub.s32 256, 256
      %148 = vsyncadd [#allocation4], %s147
      %s149 = sshll.u32 [#allocation3], 4
      %s150 = int_to_ptr.vmem [resolvable:$true] %s149
      %155 = dma.vmem_to_hbm [thread:$0]  %s150, 256, %s3, [#allocation4], 128, 128, 8
    $region25: #{gqa_forward.7} parent=1 // pred_fallthru
      _
    // Predicated region
    $region26: #{gqa_forward.7} parent=1 // pred_check
      _
    $region27: #{gqa_forward.7} parent=1 // pred_check_branch
      %157 = sbr.rel (0) target = $region29
    $region28: #{gqa_forward.7} parent=1 // pred_region
      %158 = dma.done [#allocation4], 256
    $region29: #{gqa_forward.7} parent=1 // pred_fallthru
      _
    %159 = vsyncpa [#allocation4], 1

// kernel: gqa_forward.6
$region0: #{gqa_forward.6}
  #allocation0 [shape = 'u32[]', space=smem, size = 0x4, offset = 0x4, fixed_abs, tag = 'smem constant byte address 0x4 - core index']
  #allocation1 [shape = 'u32[144,128]{1,0:T(1,128)}', space=vmem, size = 0x12000, scoped, tag = 'internal scratch']
  #allocation2 [shape = 'f32[16,1]{1,0:T(8,128)}', space=vmem, size = 0x2000, scoped, tag = 'scratch operand']
  #allocation3 [shape = 'f32[16,1]{1,0:T(8,128)}', space=vmem, size = 0x2000, scoped, tag = 'scratch operand']
  #allocation4 [shape = 'f32[16,8]{1,0:T(8,128)}', space=vmem, size = 0x2000, scoped, tag = 'scratch operand']
  %s0 = inlined_call_operand.vmem [shape: f32[2,8,2,2,8], index: 0, kind: input, shape index: {}]
  %s1 = inlined_call_operand.vmem [shape: f32[2,2,8,8], index: 1, kind: input, shape index: {}]
  %s2 = inlined_call_operand.vmem [shape: f32[2,2,8,8], index: 2, kind: input, shape index: {}]
  %s3 = inlined_call_operand.vmem [shape: f32[2,8,2,2,8], index: 3, kind: output, shape index: {}]
  %s4 = sld [smem:[#allocation0]]
  $region131: #{gqa_forward.6} parent=0
    _
  %s6 = ssub.s32 1, %s4
  %s7 = scalar_select 0, %s6, %s4
  $region1: #{gqa_forward.6} parent=0
    #allocation5 [shape = 'u8[16384]{0}', space=vmem, size = 0x4000, scoped, tag = 'input window, operand 0']
    #allocation6 [shape = 'u8[16384]{0}', space=vmem, size = 0x4000, scoped, tag = 'output window, operand 0']
    loop: start=0, step=1, limit=6
    $region2: #{gqa_forward.6} parent=1 // loop_pre_header
      _
    $region3: #{gqa_forward.6} parent=1 // loop_header
      %s9 = sphi 0, %s13
      %p10 = scmp.ge.s32.totalorder %s9, 6
      %s16 = sphi 0, %s42
      %s17 = sphi 0, %s38
      %s18 = sphi 0, %s34
      %s19 = sphi 0, %s30
      %s20 = sphi 0, %s16
      %s21 = sphi 0, %s17
      %s22 = sphi 0, %s18
      %s23 = sphi 0, %s19
      %s24 = sphi 0, %s20
      %s25 = sphi 0, %s21
      %s26 = sphi 0, %s22
      %s27 = sphi 0, %s23
      %s49 = sphi 0, %s51
      %s52 = sphi 0, %s49
      %s53 = sphi 0, %s52
      %s69 = sphi 0, %s53
      %s79 = sphi 0, %s81
      %s82 = sphi 0, %s79
      %s83 = sphi 0, %s82
      %s99 = sphi 0, %s83
      %s109 = sphi 0, %s111
      %s112 = sphi 0, %s109
      %s113 = sphi 0, %s112
      %s129 = sphi 0, %s113
      %s139 = sphi 0, %s141
      %s142 = sphi 0, %s139
      %s143 = sphi 0, %s142
      %s159 = sphi 0, %s143
    $region4: #{gqa_forward.6} parent=1 // loop_header_branch
      %12 = sbr.rel (%p10) target = $region8
    $region5: #{gqa_forward.6} parent=1 // loop_body
      %s14 = ssub.s32 %s9, 1
      %s15 = ssub.s32 %s9, 2
      %s28 = sadd.s32 1, %s19
      %p29 = scmp.ge.s32.totalorder %s28, 1
      %s30 = scalar_select %p29, 0, %s28
      %s31 = sadd.s32 1, %s18
      %s32 = scalar_select %p29, %s31, %s18
      %p33 = scmp.ge.s32.totalorder %s32, 1
      %s34 = scalar_select %p33, 0, %s32
      %s35 = sadd.s32 1, %s17
      %s36 = scalar_select %p33, %s35, %s17
      %p37 = scmp.ge.s32.totalorder %s36, 2
      %s38 = scalar_select %p37, 0, %s36
      %s39 = sadd.s32 1, %s16
      %s40 = scalar_select %p37, %s39, %s16
      %p41 = scmp.ge.s32.totalorder %s40, 2
      %s42 = scalar_select %p41, 0, %s40
      %s43 = ssub.s32 %s16, %s42
      %s44 = ssub.s32 %s18, %s34
      %s45 = sor.u32 %s43, %s44
      %s46 = ssub.s32 %s17, %s38
      %s47 = sor.u32 %s45, %s46
      %p48 = scmp.eq.s32.totalorder %s47, 0
      %s50 = sadd.s32 %s49, 1
      %s51 = scalar_select %p48, %s49, %s50
      %p54 = pneg %p48
      %p55 = scmp.eq.s32.totalorder %s9, 3
      %p56 = por %p54, %p55
      %p57 = scmp.ne.s32.totalorder %s49, %s52
      %p58 = scmp.eq.s32.totalorder %s9, 0
      %p59 = por %p57, %p58
      %p60 = scmp.ne.s32.totalorder %s49, %s52
      %p61 = scmp.eq.s32.totalorder %s14, 3
      %p62 = por %p60, %p61
      %p63 = scmp.ne.s32.totalorder %s52, %s53
      %p64 = scmp.eq.s32.totalorder %s14, 0
      %p65 = por %p63, %p64
      %p66 = scmp.ne.s32.totalorder %s52, %s53
      %p67 = scmp.eq.s32.totalorder %s15, 3
      %p68 = por %p66, %p67
      %p70 = scmp.ne.s32.totalorder %s53, %s69
      %p71 = scmp.eq.s32.totalorder %s15, 0
      %p72 = por %p70, %p71
      %s73 = ssub.s32 %s16, %s42
      %s74 = ssub.s32 %s17, %s38
      %s75 = sor.u32 %s73, %s74
      %s76 = ssub.s32 %s19, %s30
      %s77 = sor.u32 %s75, %s76
      %p78 = scmp.eq.s32.totalorder %s77, 0
      %s80 = sadd.s32 %s79, 1
      %s81 = scalar_select %p78, %s79, %s80
      %p84 = pneg %p78
      %p85 = scmp.eq.s32.totalorder %s9, 3
      %p86 = por %p84, %p85
      %p87 = scmp.ne.s32.totalorder %s79, %s82
      %p88 = scmp.eq.s32.totalorder %s9, 0
      %p89 = por %p87, %p88
      %p90 = scmp.ne.s32.totalorder %s79, %s82
      %p91 = scmp.eq.s32.totalorder %s14, 3
      %p92 = por %p90, %p91
      %p93 = scmp.ne.s32.totalorder %s82, %s83
      %p94 = scmp.eq.s32.totalorder %s14, 0
      %p95 = por %p93, %p94
      %p96 = scmp.ne.s32.totalorder %s82, %s83
      %p97 = scmp.eq.s32.totalorder %s15, 3
      %p98 = por %p96, %p97
      %p100 = scmp.ne.s32.totalorder %s83, %s99
      %p101 = scmp.eq.s32.totalorder %s15, 0
      %p102 = por %p100, %p101
      %s103 = ssub.s32 %s16, %s42
      %s104 = ssub.s32 %s17, %s38
      %s105 = sor.u32 %s103, %s104
      %s106 = ssub.s32 %s19, %s30
      %s107 = sor.u32 %s105, %s106
      %p108 = scmp.eq.s32.totalorder %s107, 0
      %s110 = sadd.s32 %s109, 1
      %s111 = scalar_select %p108, %s109, %s110
      %p114 = pneg %p108
      %p115 = scmp.eq.s32.totalorder %s9, 3
      %p116 = por %p114, %p115
      %p117 = scmp.ne.s32.totalorder %s109, %s112
      %p118 = scmp.eq.s32.totalorder %s9, 0
      %p119 = por %p117, %p118
      %p120 = scmp.ne.s32.totalorder %s109, %s112
      %p121 = scmp.eq.s32.totalorder %s14, 3
      %p122 = por %p120, %p121
      %p123 = scmp.ne.s32.totalorder %s112, %s113
      %p124 = scmp.eq.s32.totalorder %s14, 0
      %p125 = por %p123, %p124
      %p126 = scmp.ne.s32.totalorder %s112, %s113
      %p127 = scmp.eq.s32.totalorder %s15, 3
      %p128 = por %p126, %p127
      %p130 = scmp.ne.s32.totalorder %s113, %s129
      %p131 = scmp.eq.s32.totalorder %s15, 0
      %p132 = por %p130, %p131
      %s133 = ssub.s32 %s16, %s42
      %s134 = ssub.s32 %s18, %s34
      %s135 = sor.u32 %s133, %s134
      %s136 = ssub.s32 %s17, %s38
      %s137 = sor.u32 %s135, %s136
      %p138 = scmp.eq.s32.totalorder %s137, 0
      %s140 = sadd.s32 %s139, 1
      %s141 = scalar_select %p138, %s139, %s140
      %p144 = pneg %p138
      %p145 = scmp.eq.s32.totalorder %s9, 3
      %p146 = por %p144, %p145
      %p147 = scmp.ne.s32.totalorder %s139, %s142
      %p148 = scmp.eq.s32.totalorder %s9, 0
      %p149 = por %p147, %p148
      %p150 = scmp.ne.s32.totalorder %s139, %s142
      %p151 = scmp.eq.s32.totalorder %s14, 3
      %p152 = por %p150, %p151
      %p153 = scmp.ne.s32.totalorder %s142, %s143
      %p154 = scmp.eq.s32.totalorder %s14, 0
      %p155 = por %p153, %p154
      %p156 = scmp.ne.s32.totalorder %s142, %s143
      %p157 = scmp.eq.s32.totalorder %s15, 3
      %p158 = por %p156, %p157
      %p160 = scmp.ne.s32.totalorder %s143, %s159
      %p161 = scmp.eq.s32.totalorder %s15, 0
      %p162 = por %p160, %p161
      %p163 = scmp.le.s32.totalorder 1, %s9
      %p164 = scmp.lt.s32.totalorder %s9, 5
      %p165 = pnand %p163, %p164
      %p166 = pneg %p165
      // Predicated region
      $region9: #{gqa_forward.6} parent=5 // pred_check
        _
      $region10: #{gqa_forward.6} parent=5 // pred_check_branch
        %168 = sbr.rel (%p165) target = $region12
      $region11: #{gqa_forward.6} parent=5 // pred_region
        %s169 = ssub.s32 %s9, 1
      $region12: #{gqa_forward.6} parent=5 // pred_fallthru
        _
      %p170 = scmp.lt.s32.totalorder %s9, 4
      // Predicated region
      $region13: #{gqa_forward.6} parent=5 // pred_check
        %p171 = pneg %p170
      $region14: #{gqa_forward.6} parent=5 // pred_check_branch
        %173 = sbr.rel (%p171) target = $region16
      $region15: #{gqa_forward.6} parent=5 // pred_region
        // Predicated region
        $region17: #{gqa_forward.6} parent=15 // pred_check
          %p174 = pneg %p59
        $region18: #{gqa_forward.6} parent=15 // pred_check_branch
          %176 = sbr.rel (%p174) target = $region20
        $region19: #{gqa_forward.6} parent=15 // pred_region
          %s177 = sand.u32 %s49, 1
          %s178 = sand.u32 %s49, 1
          %s179 = smul.addr %s178, 16
          %s180 = scalar_lea.vmem [#allocation5], %s179
          %s181 = smul.u32 8, %s18
          %s182 = smul.addr %s181, 2
          %s183 = sadd.s32 %s17, %s182
          %s184 = smul.addr %s16, 16
          %s185 = sadd.s32 %s183, %s184
          %s186 = smul.addr %s185, 2
          %s187 = scalar_lea.vmem %s0, %s186
          // Predicated region
          $region21: #{gqa_forward.6} parent=19 // pred_check
            _
          $region22: #{gqa_forward.6} parent=19 // pred_check_branch
            %189 = sbr.rel (0) target = $region24
          $region23: #{gqa_forward.6} parent=19 // pred_region
            // Predicated region
            $region25: #{gqa_forward.6} parent=23 // pred_check
              _
            $region26: #{gqa_forward.6} parent=23 // pred_check_branch
              %191 = sbr.rel target = $region28
            $region27: #{gqa_forward.6} parent=23 // pred_region
              // Predicated region
              $region40: #{gqa_forward.6} parent=27 // pred_check
                _
              $region41: #{gqa_forward.6} parent=27 // pred_check_branch
                %220 = sbr.rel (0) target = $region43
              $region42: #{gqa_forward.6} parent=27 // pred_region
                loop: start=0, step=1, limit=1
                $region44: #{gqa_forward.6} parent=42 // loop_pre_header
                  _
                $region45: #{gqa_forward.6} parent=42 // loop_header
                  %s222 = sphi 0, %s226
                  %p223 = scmp.ge.s32.totalorder %s222, 1
                  %s227 = sphi %s187, %s187
                  %s228 = sphi %s180, %s180
                $region46: #{gqa_forward.6} parent=42 // loop_header_branch
                  %225 = sbr.rel (%p223) target = $region50
                $region47: #{gqa_forward.6} parent=42 // loop_body
                  _
                $region48: #{gqa_forward.6} parent=42 // loop_footer
                  %s226 = sadd.s32 1, %s222
                $region49: #{gqa_forward.6} parent=42 // loop_footer_branch
                  %221 = sbr.rel target = $region45
                $region50: #{gqa_forward.6} parent=42 // loop_exit
                  _
                loop: start=0, step=1, limit=1
                $region51: #{gqa_forward.6} parent=42 // loop_pre_header
                  _
                $region52: #{gqa_forward.6} parent=42 // loop_header
                  %s231 = sphi 0, %s235
                  %p232 = scmp.ge.s32.totalorder %s231, 1
                  %s236 = sphi %s187, %s187
                  %s237 = sphi %s180, %s180
                $region53: #{gqa_forward.6} parent=42 // loop_header_branch
                  %234 = sbr.rel (%p232) target = $region57
                $region54: #{gqa_forward.6} parent=42 // loop_body
                  %v238 = vld [vmem:[%s236] sm:$0x3]
                  %239 = vst [vmem:[%s237] sm:$0x3] %v238
                  %v240 = vld [vmem:[%s236 + $0x4] sm:$0x3]
                  %241 = vst [vmem:[%s237 + $0x2] sm:$0x3] %v240
                  %v242 = vld [vmem:[%s236 + $0x8] sm:$0x3]
                  %243 = vst [vmem:[%s237 + $0x4] sm:$0x3] %v242
                  %v244 = vld [vmem:[%s236 + $0xc] sm:$0x3]
                  %245 = vst [vmem:[%s237 + $0x6] sm:$0x3] %v244
                  %v246 = vld [vmem:[%s236 + $0x10] sm:$0x3]
                  %247 = vst [vmem:[%s237 + $0x8] sm:$0x3] %v246
                  %v248 = vld [vmem:[%s236 + $0x14] sm:$0x3]
                  %249 = vst [vmem:[%s237 + $0xa] sm:$0x3] %v248
                  %v250 = vld [vmem:[%s236 + $0x18] sm:$0x3]
                  %251 = vst [vmem:[%s237 + $0xc] sm:$0x3] %v250
                  %v252 = vld [vmem:[%s236 + $0x1c] sm:$0x3]
                  %253 = vst [vmem:[%s237 + $0xe] sm:$0x3] %v252
                $region55: #{gqa_forward.6} parent=42 // loop_footer
                  %s235 = sadd.s32 1, %s231
                $region56: #{gqa_forward.6} parent=42 // loop_footer_branch
                  %230 = sbr.rel target = $region52
                $region57: #{gqa_forward.6} parent=42 // loop_exit
                  _
              $region43: #{gqa_forward.6} parent=27 // pred_fallthru
                _
            $region28: #{gqa_forward.6} parent=23 // pred_fallthru
              _
            // Predicated region
            $region29: #{gqa_forward.6} parent=23 // pred_check
              _
            $region30: #{gqa_forward.6} parent=23 // pred_check_branch
              %193 = sbr.rel (0) target = $region32
            $region31: #{gqa_forward.6} parent=23 // pred_region
              loop: start=0, step=1, limit=1
              $region33: #{gqa_forward.6} parent=31 // loop_pre_header
                _
              $region34: #{gqa_forward.6} parent=31 // loop_header
                %s196 = sphi 0, %s200
                %p197 = scmp.ge.s32.totalorder %s196, 1
                %s201 = sphi %s187, %s187
                %s202 = sphi %s180, %s180
              $region35: #{gqa_forward.6} parent=31 // loop_header_branch
                %199 = sbr.rel (%p197) target = $region39
              $region36: #{gqa_forward.6} parent=31 // loop_body
                %v203 = vld [vmem:[%s201] sm:$0x3]
                %204 = vst [vmem:[%s202] sm:$0x3] %v203
                %v205 = vld [vmem:[%s201 + $0x4] sm:$0x3]
                %206 = vst [vmem:[%s202 + $0x2] sm:$0x3] %v205
                %v207 = vld [vmem:[%s201 + $0x8] sm:$0x3]
                %208 = vst [vmem:[%s202 + $0x4] sm:$0x3] %v207
                %v209 = vld [vmem:[%s201 + $0xc] sm:$0x3]
                %210 = vst [vmem:[%s202 + $0x6] sm:$0x3] %v209
                %v211 = vld [vmem:[%s201 + $0x10] sm:$0x3]
                %212 = vst [vmem:[%s202 + $0x8] sm:$0x3] %v211
                %v213 = vld [vmem:[%s201 + $0x14] sm:$0x3]
                %214 = vst [vmem:[%s202 + $0xa] sm:$0x3] %v213
                %v215 = vld [vmem:[%s201 + $0x18] sm:$0x3]
                %216 = vst [vmem:[%s202 + $0xc] sm:$0x3] %v215
                %v217 = vld [vmem:[%s201 + $0x1c] sm:$0x3]
                %218 = vst [vmem:[%s202 + $0xe] sm:$0x3] %v217
              $region37: #{gqa_forward.6} parent=31 // loop_footer
                %s200 = sadd.s32 1, %s196
              $region38: #{gqa_forward.6} parent=31 // loop_footer_branch
                %195 = sbr.rel target = $region34
              $region39: #{gqa_forward.6} parent=31 // loop_exit
                _
            $region32: #{gqa_forward.6} parent=23 // pred_fallthru
              _
          $region24: #{gqa_forward.6} parent=19 // pred_fallthru
            _
          %254 = vnop
        $region20: #{gqa_forward.6} parent=15 // pred_fallthru
          _
        // Predicated region
        $region58: #{gqa_forward.6} parent=15 // pred_check
          %p255 = pneg %p89
        $region59: #{gqa_forward.6} parent=15 // pred_check_branch
          %257 = sbr.rel (%p255) target = $region61
        $region60: #{gqa_forward.6} parent=15 // pred_region
          %p258 = scmp.lt.s32.totalorder %s16, 1
          %s259 = scalar_select %p258, %s16, 1
          %p260 = scmp.lt.s32.totalorder %s17, 1
          %s261 = scalar_select %p260, %s17, 1
          %p262 = scmp.lt.s32.totalorder %s19, 0
          %s263 = scalar_select %p262, %s19, 0
          %s264 = sadd.s32 %s263, %s261
          %s265 = smul.addr %s259, 2
          %s266 = sadd.s32 %s264, %s265
          %s267 = smul.addr %s266, 8
          %s268 = scalar_lea.vmem %s1, %s267
        $region61: #{gqa_forward.6} parent=15 // pred_fallthru
          _
        // Predicated region
        $region62: #{gqa_forward.6} parent=15 // pred_check
          %p269 = pneg %p119
        $region63: #{gqa_forward.6} parent=15 // pred_check_branch
          %271 = sbr.rel (%p269) target = $region65
        $region64: #{gqa_forward.6} parent=15 // pred_region
          %p272 = scmp.lt.s32.totalorder %s16, 1
          %s273 = scalar_select %p272, %s16, 1
          %p274 = scmp.lt.s32.totalorder %s17, 1
          %s275 = scalar_select %p274, %s17, 1
          %p276 = scmp.lt.s32.totalorder %s19, 0
          %s277 = scalar_select %p276, %s19, 0
          %s278 = sadd.s32 %s277, %s275
          %s279 = smul.addr %s273, 2
          %s280 = sadd.s32 %s278, %s279
          %s281 = smul.addr %s280, 8
          %s282 = scalar_lea.vmem %s2, %s281
        $region65: #{gqa_forward.6} parent=15 // pred_fallthru
          _
      $region16: #{gqa_forward.6} parent=5 // pred_fallthru
        _
      %p283 = scmp.le.s32.totalorder 1, %s9
      %p284 = scmp.lt.s32.totalorder %s9, 5
      %p285 = pnand %p283, %p284
      %p286 = pneg %p285
      // Predicated region
      $region66: #{gqa_forward.6} parent=5 // pred_check
        _
      $region67: #{gqa_forward.6} parent=5 // pred_check_branch
        %288 = sbr.rel (%p285) target = $region69
      $region68: #{gqa_forward.6} parent=5 // pred_region
        %s289 = ssub.s32 %s9, 1
        %s290 = sand.u32 %s52, 1
        %s291 = sand.u32 %s52, 1
        %s292 = smul.addr %s291, 16
        %s293 = scalar_lea.vmem [#allocation5], %s292
        // Predicated region
        $region70: #{gqa_forward.6} parent=68 // pred_check
          %p294 = pneg %p65
        $region71: #{gqa_forward.6} parent=68 // pred_check_branch
          %296 = sbr.rel (%p294) target = $region73
        $region72: #{gqa_forward.6} parent=68 // pred_region
          _
        $region73: #{gqa_forward.6} parent=68 // pred_fallthru
          _
        %s297 = sand.u32 %s52, 1
        %s298 = sand.u32 %s52, 1
        %s299 = smul.addr %s298, 16
        %s300 = scalar_lea.vmem [#allocation5], %s299
        %p301 = pneg %p65
        %p302 = pneg %p62
        %p303 = scmp.lt.s32.totalorder %s20, 1
        %s304 = scalar_select %p303, %s20, 1
        %p305 = scmp.lt.s32.totalorder %s21, 1
        %s306 = scalar_select %p305, %s21, 1
        %p307 = scmp.lt.s32.totalorder %s23, 0
        %s308 = scalar_select %p307, %s23, 0
        %s309 = sadd.s32 %s308, %s306
        %s310 = smul.addr %s304, 2
        %s311 = sadd.s32 %s309, %s310
        %s312 = smul.addr %s311, 8
        %s313 = scalar_lea.vmem %s1, %s312
        %p314 = pneg %p95
        %p315 = pneg %p92
        %p316 = scmp.lt.s32.totalorder %s20, 1
        %s317 = scalar_select %p316, %s20, 1
        %p318 = scmp.lt.s32.totalorder %s21, 1
        %s319 = scalar_select %p318, %s21, 1
        %p320 = scmp.lt.s32.totalorder %s23, 0
        %s321 = scalar_select %p320, %s23, 0
        %s322 = sadd.s32 %s321, %s319
        %s323 = smul.addr %s317, 2
        %s324 = sadd.s32 %s322, %s323
        %s325 = smul.addr %s324, 8
        %s326 = scalar_lea.vmem %s2, %s325
        %p327 = pneg %p125
        %p328 = pneg %p122
        %p329 = pneg %p155
        %p330 = pneg %p152
        %s331 = sand.u32 %s142, 1
        %s332 = sand.u32 %s142, 1
        %s333 = smul.addr %s332, 16
        %s334 = scalar_lea.vmem [#allocation6], %s333
        %s335 = smul.u32 8, %s22
        %p336 = scmp.lt.s32.totalorder %s20, 1
        %s337 = scalar_select %p336, %s20, 1
        %p338 = scmp.lt.s32.totalorder %s21, 1
        %s339 = scalar_select %p338, %s21, 1
        %p340 = scmp.lt.s32.totalorder %s23, 0
        %s341 = scalar_select %p340, %s23, 0
        %s342 = sadd.s32 %s341, %s339
        %s343 = smul.addr %s337, 2
        %s344 = sadd.s32 %s342, %s343
        %s345 = smul.addr %s344, 8
        %s346 = scalar_lea.vmem %s1, %s345
        %p347 = scmp.lt.s32.totalorder %s20, 1
        %s348 = scalar_select %p347, %s20, 1
        %p349 = scmp.lt.s32.totalorder %s21, 1
        %s350 = scalar_select %p349, %s21, 1
        %p351 = scmp.lt.s32.totalorder %s23, 0
        %s352 = scalar_select %p351, %s23, 0
        %s353 = sadd.s32 %s352, %s350
        %s354 = smul.addr %s348, 2
        %s355 = sadd.s32 %s353, %s354
        %s356 = smul.addr %s355, 8
        %s357 = scalar_lea.vmem %s2, %s356
        %s358 = smul.u32 8, %s22
        %p359 = scmp.eq.s32.totalorder %s23, 0
        // Predicated region
        $region74: #{gqa_forward.6} parent=68 // pred_check
          %p360 = pneg %p359
        $region75: #{gqa_forward.6} parent=68 // pred_check_branch
          %362 = sbr.rel (%p360) target = $region77
        $region76: #{gqa_forward.6} parent=68 // pred_region
          %vm363 = vcmask 7168
          %364 = vst.msk [vmem:[#allocation2] sm:$0xff] %vm363, -inf
          %365 = vst.msk [vmem:[#allocation2 + $0x8] sm:$0xff] %vm363, -inf
          %366 = vst.msk [vmem:[#allocation3] sm:$0xff] %vm363, 0.0
          %367 = vst.msk [vmem:[#allocation3 + $0x8] sm:$0xff] %vm363, 0.0
          %vm368 = vcmask 64512
          %369 = vst.msk [vmem:[#allocation4] sm:$0xff] %vm368, 0.0
          %370 = vst.msk [vmem:[#allocation4 + $0x8] sm:$0xff] %vm368, 0.0
        $region77: #{gqa_forward.6} parent=68 // pred_fallthru
          _
        %v371 = vld [vmem:[%s293] sm:$0x3]
        %v372 = vld [vmem:[%s293 + $0x2] sm:$0x3]
        %v373 = vld [vmem:[%s293 + $0x4] sm:$0x3]
        %v374 = vld [vmem:[%s293 + $0x6] sm:$0x3]
        %v375 = vld [vmem:[%s293 + $0x8] sm:$0x3]
        %v376 = vld [vmem:[%s293 + $0xa] sm:$0x3]
        %v377 = vld [vmem:[%s293 + $0xc] sm:$0x3]
        %v378 = vld [vmem:[%s293 + $0xe] sm:$0x3]
        %v379 = vld [vmem:[%s346] sm:$0xff]
        %v380 = vld [vmem:[%s357] sm:$0xff]
        %v389 = vcombine.low %v371, %v372
        %v390 = vcombine.low %v373, %v374
        %v392 = vunpack.c.l.s4 1983009808
        %v393 = vunpack.c.0.s8 %v392
        %v394 = vlaneseq
        %v395 = vshrl.u32 %v394, 7
        %v396 = vsub.s32 %v393, %v395
        %v397 = vrot.slane %v389, %v396
        %v399 = vunpack.c.l.s4 1983009808
        %v400 = vunpack.c.0.s8 %v399
        %v401 = vlaneseq
        %v402 = vshrl.u32 %v401, 7
        %v403 = vsub.s32 %v400, %v402
        %v404 = vrot.slane %v390, %v403
        %v405 = vcombine.low %v397, %v404
        %v406 = vcombine.low %v375, %v376
        %v407 = vcombine.low %v377, %v378
        %v409 = vunpack.c.l.s4 1983009808
        %v410 = vunpack.c.0.s8 %v409
        %v411 = vlaneseq
        %v412 = vshrl.u32 %v411, 7
        %v413 = vsub.s32 %v410, %v412
        %v414 = vrot.slane %v406, %v413
        %v416 = vunpack.c.l.s4 1983009808
        %v417 = vunpack.c.0.s8 %v416
        %v418 = vlaneseq
        %v419 = vshrl.u32 %v418, 7
        %v420 = vsub.s32 %v417, %v419
        %v421 = vrot.slane %v407, %v420
        %v422 = vcombine.low %v414, %v421
        %vm423 = vcmask 64512
        %v424 = vsel %vm423, %v405, 0
        %v426 = vsel %vm423, %v422, 0
        %v429 = vsel %vm423, %v379, 0
        %431 = vmatprep.subr.mxu0 0.0
        %432 = vmatpush1.xpose.msra.mxu0 %v429
        %433 = vmatprep.subr.mxu0 0.0
        %434 = vmatpush1.xpose.msra.mxu0 0.0
        %435 = vmatprep.subr.mxu0 0.0
        %436 = vmatpush1.xpose.msra.mxu0 0.0
        %437 = vmatprep.subr.mxu0 0.0
        %438 = vmatpush1.xpose.msra.mxu0 0.0
        %439 = vmatprep.subr.mxu0 0.0
        %440 = vmatpush1.xpose.msra.mxu0 0.0
        %441 = vmatprep.subr.mxu0 0.0
        %442 = vmatpush1.xpose.msra.mxu0 0.0
        %443 = vmatprep.subr.mxu0 0.0
        %444 = vmatpush1.xpose.msra.mxu0 0.0
        %445 = vmatprep.subr.mxu0 0.0
        %446 = vmatpush1.xpose.msra.mxu0 0.0
        %447 = vmatprep.subr.mxu0 0.0
        %448 = vmatpush1.xpose.msra.mxu0 0.0
        %449 = vmatprep.subr.mxu0 0.0
        %450 = vmatpush1.xpose.msra.mxu0 0.0
        %451 = vmatprep.subr.mxu0 0.0
        %452 = vmatpush1.xpose.msra.mxu0 0.0
        %453 = vmatprep.subr.mxu0 0.0
        %454 = vmatpush1.xpose.msra.mxu0 0.0
        %455 = vmatprep.subr.mxu0 0.0
        %456 = vmatpush1.xpose.msra.mxu0 0.0
        %457 = vmatprep.subr.mxu0 0.0
        %458 = vmatpush1.xpose.msra.mxu0 0.0
        %459 = vmatprep.subr.mxu0 0.0
        %460 = vmatpush1.xpose.msra.mxu0 0.0
        %461 = vmatprep.subr.mxu0 0.0
        %462 = vmatpush1.xpose.msra.mxu0 0.0
        %463 = vmatprep.subr.mxu0 0.0
        %464 = vmatpush1.xpose.msra.mxu0 0.0
        %465 = vmatprep.subr.mxu0 0.0
        %466 = vmatpush1.xpose.msra.mxu0 0.0
        %467 = vmatprep.subr.mxu0 0.0
        %468 = vmatpush1.xpose.msra.mxu0 0.0
        %469 = vmatprep.subr.mxu0 0.0
        %470 = vmatpush1.xpose.msra.mxu0 0.0
        %471 = vmatprep.subr.mxu0 0.0
        %472 = vmatpush1.xpose.msra.mxu0 0.0
        %473 = vmatprep.subr.mxu0 0.0
        %474 = vmatpush1.xpose.msra.mxu0 0.0
        %475 = vmatprep.subr.mxu0 0.0
        %476 = vmatpush1.xpose.msra.mxu0 0.0
        %477 = vmatprep.subr.mxu0 0.0
        %478 = vmatpush1.xpose.msra.mxu0 0.0
        %479 = vmatprep.subr.mxu0 0.0
        %480 = vmatpush1.xpose.msra.mxu0 0.0
        %481 = vmatprep.subr.mxu0 0.0
        %482 = vmatpush1.xpose.msra.mxu0 0.0
        %483 = vmatprep.subr.mxu0 0.0
        %484 = vmatpush1.xpose.msra.mxu0 0.0
        %485 = vmatprep.subr.mxu0 0.0
        %486 = vmatpush1.xpose.msra.mxu0 0.0
        %487 = vmatprep.subr.mxu0 0.0
        %488 = vmatpush1.xpose.msra.mxu0 0.0
        %489 = vmatprep.subr.mxu0 0.0
        %490 = vmatpush1.xpose.msra.mxu0 0.0
        %491 = vmatprep.subr.mxu0 0.0
        %492 = vmatpush1.xpose.msra.mxu0 0.0
        %493 = vmatprep.subr.mxu0 0.0
        %494 = vmatpush1.xpose.msra.mxu0 0.0
        %495 = vmatprep.mubr.f32.mxu0 0.0
        %496 = vmatmul.mubr.f32.gmra.mrb[0].mxu0 %v424
        %v497 = vpop.f32.mrb[0].mxu0
        %v498 = vadd.f32 0.0, %v497
        %v499 = vpop.f32.mrb[0].mxu0
        %500 = vmatprep.mubr.f32.mxu0 0.0
        %501 = vmatmul.mubr.f32.gmra.mrb[0].mxu0 %v426
        %v502 = vpop.f32.mrb[0].mxu0
        %v503 = vadd.f32 0.0, %v502
        %v504 = vpop.f32.mrb[0].mxu0
        %505 = vdwg.mxu0
        %v506 = vld [vmem:[#allocation2] sm:$0xff]
        %v507 = vld [vmem:[#allocation2 + $0x8] sm:$0xff]
        %v508 = vsel %vm423, %v498, -inf
        %509 = vmax.xlane.f32.xlu0 %v508
        %v510 = vpop.xlane.xlu0 %509
        %v511 = vsel %vm423, %v503, -inf
        %512 = vmax.xlane.f32.xlu0 %v511
        %v513 = vpop.xlane.xlu0 %512
        %v514 = vmax.f32 %v506, %v510
        %v515 = vmax.f32 %v507, %v513
        %v516 = vsub.f32 %v506, %v514
        %v517 = vsub.f32 %v507, %v515
        %v518 = vmul.f32 %v516, 1.442695
        %v519 = vpow.pop %v518
        %v520 = vmul.f32 %v517, 1.442695
        %v521 = vpow.pop %v520
        %523 = vset.pattern.permute.xlu0 0
        %524 = vperm.xlu0 %523, %v514
        %v525 = vpop.permute.xlu0 %524
        %528 = vset.pattern.permute.xlu0 0
        %529 = vperm.xlu0 %528, %v515
        %v530 = vpop.permute.xlu0 %529
        %v532 = vsub.f32 %v498, %v525
        %v533 = vsub.f32 %v503, %v530
        %v534 = vmul.f32 %v532, 1.442695
        %v535 = vpow.pop %v534
        %v536 = vmul.f32 %v533, 1.442695
        %v537 = vpow.pop %v536
        %v538 = vld [vmem:[#allocation3] sm:$0xff]
        %v539 = vld [vmem:[#allocation3 + $0x8] sm:$0xff]
        %v540 = vmul.f32 %v519, %v538
        %v541 = vmul.f32 %v521, %v539
        %v542 = vsel %vm423, %v535, 0.0
        %543 = vadd.xlane.f32.xlu0 %v542
        %v544 = vpop.xlane.xlu0 %543
        %v545 = vsel %vm423, %v537, 0.0
        %546 = vadd.xlane.f32.xlu0 %v545
        %v547 = vpop.xlane.xlu0 %546
        %v548 = vadd.f32 %v540, %v544
        %v549 = vadd.f32 %v541, %v547
        %vm550 = vcmask 7168
        %551 = vst.msk [vmem:[#allocation3] sm:$0xff] %vm550, %v548
        %552 = vst.msk [vmem:[#allocation3 + $0x8] sm:$0xff] %vm550, %v549
        %v553 = vld [vmem:[#allocation4] sm:$0xff]
        %v554 = vld [vmem:[#allocation4 + $0x8] sm:$0xff]
        %556 = vset.pattern.permute.xlu0 0
        %557 = vperm.xlu0 %556, %v519
        %v558 = vpop.permute.xlu0 %557
        %561 = vset.pattern.permute.xlu0 0
        %562 = vperm.xlu0 %561, %v521
        %v563 = vpop.permute.xlu0 %562
        %v565 = vmul.f32 %v558, %v553
        %v566 = vmul.f32 %v563, %v554
        %v568 = vsel %vm423, %v535, 0
        %v571 = vsel %vm423, %v537, 0
        %573 = vmatprep.subr.mxu0 0.0
        %574 = vmatpush1.msra.mxu0 %v380
        %575 = vmatprep.subr.mxu0 0.0
        %576 = vmatpush1.msra.mxu0 0.0
        %577 = vmatprep.subr.mxu0 0.0
        %578 = vmatpush1.msra.mxu0 0.0
        %579 = vmatprep.subr.mxu0 0.0
        %580 = vmatpush1.msra.mxu0 0.0
        %581 = vmatprep.subr.mxu0 0.0
        %582 = vmatpush1.msra.mxu0 0.0
        %583 = vmatprep.subr.mxu0 0.0
        %584 = vmatpush1.msra.mxu0 0.0
        %585 = vmatprep.subr.mxu0 0.0
        %586 = vmatpush1.msra.mxu0 0.0
        %587 = vmatprep.subr.mxu0 0.0
        %588 = vmatpush1.msra.mxu0 0.0
        %589 = vmatprep.subr.mxu0 0.0
        %590 = vmatpush1.msra.mxu0 0.0
        %591 = vmatprep.subr.mxu0 0.0
        %592 = vmatpush1.msra.mxu0 0.0
        %593 = vmatprep.subr.mxu0 0.0
        %594 = vmatpush1.msra.mxu0 0.0
        %595 = vmatprep.subr.mxu0 0.0
        %596 = vmatpush1.msra.mxu0 0.0
        %597 = vmatprep.subr.mxu0 0.0
        %598 = vmatpush1.msra.mxu0 0.0
        %599 = vmatprep.subr.mxu0 0.0
        %600 = vmatpush1.msra.mxu0 0.0
        %601 = vmatprep.subr.mxu0 0.0
        %602 = vmatpush1.msra.mxu0 0.0
        %603 = vmatprep.subr.mxu0 0.0
        %604 = vmatpush1.msra.mxu0 0.0
        %605 = vmatprep.subr.mxu0 0.0
        %606 = vmatpush1.msra.mxu0 0.0
        %607 = vmatprep.subr.mxu0 0.0
        %608 = vmatpush1.msra.mxu0 0.0
        %609 = vmatprep.subr.mxu0 0.0
        %610 = vmatpush1.msra.mxu0 0.0
        %611 = vmatprep.subr.mxu0 0.0
        %612 = vmatpush1.msra.mxu0 0.0
        %613 = vmatprep.subr.mxu0 0.0
        %614 = vmatpush1.msra.mxu0 0.0
        %615 = vmatprep.subr.mxu0 0.0
        %616 = vmatpush1.msra.mxu0 0.0
        %617 = vmatprep.subr.mxu0 0.0
        %618 = vmatpush1.msra.mxu0 0.0
        %619 = vmatprep.subr.mxu0 0.0
        %620 = vmatpush1.msra.mxu0 0.0
        %621 = vmatprep.subr.mxu0 0.0
        %622 = vmatpush1.msra.mxu0 0.0
        %623 = vmatprep.subr.mxu0 0.0
        %624 = vmatpush1.msra.mxu0 0.0
        %625 = vmatprep.subr.mxu0 0.0
        %626 = vmatpush1.msra.mxu0 0.0
        %627 = vmatprep.subr.mxu0 0.0
        %628 = vmatpush1.msra.mxu0 0.0
        %629 = vmatprep.subr.mxu0 0.0
        %630 = vmatpush1.msra.mxu0 0.0
        %631 = vmatprep.subr.mxu0 0.0
        %632 = vmatpush1.msra.mxu0 0.0
        %633 = vmatprep.subr.mxu0 0.0
        %634 = vmatpush1.msra.mxu0 0.0
        %635 = vmatprep.subr.mxu0 0.0
        %636 = vmatpush1.msra.mxu0 0.0
        %637 = vmatprep.mubr.f32.mxu0 0.0
        %638 = vmatmul.mubr.f32.gmra.mrb[0].mxu0 %v568
        %v639 = vpop.f32.mrb[0].mxu0
        %v640 = vadd.f32 0.0, %v639
        %v641 = vpop.f32.mrb[0].mxu0
        %642 = vmatprep.mubr.f32.mxu0 0.0
        %643 = vmatmul.mubr.f32.gmra.mrb[0].mxu0 %v571
        %v644 = vpop.f32.mrb[0].mxu0
        %v645 = vadd.f32 0.0, %v644
        %v646 = vpop.f32.mrb[0].mxu0
        %647 = vdwg.mxu0
        %v648 = vadd.f32 %v565, %v640
        %v649 = vadd.f32 %v566, %v645
        %650 = vst.msk [vmem:[#allocation4] sm:$0xff] %vm423, %v648
        %651 = vst.msk [vmem:[#allocation4 + $0x8] sm:$0xff] %vm423, %v649
        %652 = vst.msk [vmem:[#allocation2] sm:$0xff] %vm550, %v514
        %653 = vst.msk [vmem:[#allocation2 + $0x8] sm:$0xff] %vm550, %v515
        // Predicated region
        $region78: #{gqa_forward.6} parent=68 // pred_check
          %p654 = pneg %p359
        $region79: #{gqa_forward.6} parent=68 // pred_check_branch
          %656 = sbr.rel (%p654) target = $region81
        $region80: #{gqa_forward.6} parent=68 // pred_region
          %v657 = vld [vmem:[#allocation3] sm:$0xff]
          %v658 = vld [vmem:[#allocation3 + $0x8] sm:$0xff]
          %v659 = vrcp.pop %v657
          %v660 = vrcp.pop %v658
          %v661 = vld [vmem:[#allocation4] sm:$0xff]
          %v662 = vld [vmem:[#allocation4 + $0x8] sm:$0xff]
          %664 = vset.pattern.permute.xlu0 0
          %665 = vperm.xlu0 %664, %v659
          %v666 = vpop.permute.xlu0 %665
          %669 = vset.pattern.permute.xlu0 0
          %670 = vperm.xlu0 %669, %v660
          %v671 = vpop.permute.xlu0 %670
          %v673 = vmul.f32 %v661, %v666
          %v674 = vmul.f32 %v662, %v671
          %v677 = vcombine.high %v673, %v673
          %v679 = vunpack.c.l.s4 1983009808
          %v680 = vunpack.c.0.s8 %v679
          %v681 = vlaneseq
          %v682 = vshrl.u32 %v681, 7
          %v683 = vsub.s32 %v680, %v682
          %v684 = vrot.slane %v673, %v683
          %v686 = vunpack.c.l.s4 1983009808
          %v687 = vunpack.c.0.s8 %v686
          %v688 = vlaneseq
          %v689 = vshrl.u32 %v688, 7
          %v690 = vsub.s32 %v687, %v689
          %v691 = vrot.slane %v677, %v690
          %v692 = vcombine.high %v684, %v684
          %v693 = vcombine.high %v691, %v691
          %v694 = vcombine.high %v674, %v674
          %v696 = vunpack.c.l.s4 1983009808
          %v697 = vunpack.c.0.s8 %v696
          %v698 = vlaneseq
          %v699 = vshrl.u32 %v698, 7
          %v700 = vsub.s32 %v697, %v699
          %v701 = vrot.slane %v674, %v700
          %v703 = vunpack.c.l.s4 1983009808
          %v704 = vunpack.c.0.s8 %v703
          %v705 = vlaneseq
          %v706 = vshrl.u32 %v705, 7
          %v707 = vsub.s32 %v704, %v706
          %v708 = vrot.slane %v694, %v707
          %v709 = vcombine.high %v701, %v701
          %v710 = vcombine.high %v708, %v708
          %vm719 = vcmask 58368
          %720 = vst.msk [vmem:[%s334] sm:$0x3] %vm719, %v684
          %721 = vst.msk [vmem:[%s334 + $0x2] sm:$0x3] %vm719, %v692
          %722 = vst.msk [vmem:[%s334 + $0x4] sm:$0x3] %vm719, %v691
          %723 = vst.msk [vmem:[%s334 + $0x6] sm:$0x3] %vm719, %v693
          %724 = vst.msk [vmem:[%s334 + $0x8] sm:$0x3] %vm719, %v701
          %725 = vst.msk [vmem:[%s334 + $0xa] sm:$0x3] %vm719, %v709
          %726 = vst.msk [vmem:[%s334 + $0xc] sm:$0x3] %vm719, %v708
          %727 = vst.msk [vmem:[%s334 + $0xe] sm:$0x3] %vm719, %v710
        $region81: #{gqa_forward.6} parent=68 // pred_fallthru
          _
        %s728 = sand.u32 %s142, 1
        %s729 = sand.u32 %s142, 1
        %s730 = smul.addr %s729, 16
        %s731 = scalar_lea.vmem [#allocation6], %s730
        // Predicated region
        $region82: #{gqa_forward.6} parent=68 // pred_check
          %p732 = pneg %p152
        $region83: #{gqa_forward.6} parent=68 // pred_check_branch
          %734 = sbr.rel (%p732) target = $region85
        $region84: #{gqa_forward.6} parent=68 // pred_region
          %s735 = smul.u32 8, %s22
          %s736 = smul.addr %s735, 2
          %s737 = sadd.s32 %s21, %s736
          %s738 = smul.addr %s20, 16
          %s739 = sadd.s32 %s737, %s738
          %s740 = smul.addr %s739, 2
          %s741 = scalar_lea.vmem %s3, %s740
          // Predicated region
          $region86: #{gqa_forward.6} parent=84 // pred_check
            _
          $region87: #{gqa_forward.6} parent=84 // pred_check_branch
            %743 = sbr.rel (0) target = $region89
          $region88: #{gqa_forward.6} parent=84 // pred_region
            // Predicated region
            $region90: #{gqa_forward.6} parent=88 // pred_check
              _
            $region91: #{gqa_forward.6} parent=88 // pred_check_branch
              %745 = sbr.rel target = $region93
            $region92: #{gqa_forward.6} parent=88 // pred_region
              // Predicated region
              $region105: #{gqa_forward.6} parent=92 // pred_check
                _
              $region106: #{gqa_forward.6} parent=92 // pred_check_branch
                %774 = sbr.rel (0) target = $region108
              $region107: #{gqa_forward.6} parent=92 // pred_region
                loop: start=0, step=1, limit=1
                $region109: #{gqa_forward.6} parent=107 // loop_pre_header
                  _
                $region110: #{gqa_forward.6} parent=107 // loop_header
                  %s776 = sphi 0, %s780
                  %p777 = scmp.ge.s32.totalorder %s776, 1
                  %s781 = sphi %s731, %s731
                  %s782 = sphi %s741, %s741
                $region111: #{gqa_forward.6} parent=107 // loop_header_branch
                  %779 = sbr.rel (%p777) target = $region115
                $region112: #{gqa_forward.6} parent=107 // loop_body
                  _
                $region113: #{gqa_forward.6} parent=107 // loop_footer
                  %s780 = sadd.s32 1, %s776
                $region114: #{gqa_forward.6} parent=107 // loop_footer_branch
                  %775 = sbr.rel target = $region110
                $region115: #{gqa_forward.6} parent=107 // loop_exit
                  _
                loop: start=0, step=1, limit=1
                $region116: #{gqa_forward.6} parent=107 // loop_pre_header
                  _
                $region117: #{gqa_forward.6} parent=107 // loop_header
                  %s785 = sphi 0, %s789
                  %p786 = scmp.ge.s32.totalorder %s785, 1
                  %s790 = sphi %s731, %s731
                  %s791 = sphi %s741, %s741
                $region118: #{gqa_forward.6} parent=107 // loop_header_branch
                  %788 = sbr.rel (%p786) target = $region122
                $region119: #{gqa_forward.6} parent=107 // loop_body
                  %v792 = vld [vmem:[%s790] sm:$0x3]
                  %793 = vst [vmem:[%s791] sm:$0x3] %v792
                  %v794 = vld [vmem:[%s790 + $0x2] sm:$0x3]
                  %795 = vst [vmem:[%s791 + $0x4] sm:$0x3] %v794
                  %v796 = vld [vmem:[%s790 + $0x4] sm:$0x3]
                  %797 = vst [vmem:[%s791 + $0x8] sm:$0x3] %v796
                  %v798 = vld [vmem:[%s790 + $0x6] sm:$0x3]
                  %799 = vst [vmem:[%s791 + $0xc] sm:$0x3] %v798
                  %v800 = vld [vmem:[%s790 + $0x8] sm:$0x3]
                  %801 = vst [vmem:[%s791 + $0x10] sm:$0x3] %v800
                  %v802 = vld [vmem:[%s790 + $0xa] sm:$0x3]
                  %803 = vst [vmem:[%s791 + $0x14] sm:$0x3] %v802
                  %v804 = vld [vmem:[%s790 + $0xc] sm:$0x3]
                  %805 = vst [vmem:[%s791 + $0x18] sm:$0x3] %v804
                  %v806 = vld [vmem:[%s790 + $0xe] sm:$0x3]
                  %807 = vst [vmem:[%s791 + $0x1c] sm:$0x3] %v806
                $region120: #{gqa_forward.6} parent=107 // loop_footer
                  %s789 = sadd.s32 1, %s785
                $region121: #{gqa_forward.6} parent=107 // loop_footer_branch
                  %784 = sbr.rel target = $region117
                $region122: #{gqa_forward.6} parent=107 // loop_exit
                  _
              $region108: #{gqa_forward.6} parent=92 // pred_fallthru
                _
            $region93: #{gqa_forward.6} parent=88 // pred_fallthru
              _
            // Predicated region
            $region94: #{gqa_forward.6} parent=88 // pred_check
              _
            $region95: #{gqa_forward.6} parent=88 // pred_check_branch
              %747 = sbr.rel (0) target = $region97
            $region96: #{gqa_forward.6} parent=88 // pred_region
              loop: start=0, step=1, limit=1
              $region98: #{gqa_forward.6} parent=96 // loop_pre_header
                _
              $region99: #{gqa_forward.6} parent=96 // loop_header
                %s750 = sphi 0, %s754
                %p751 = scmp.ge.s32.totalorder %s750, 1
                %s755 = sphi %s731, %s731
                %s756 = sphi %s741, %s741
              $region100: #{gqa_forward.6} parent=96 // loop_header_branch
                %753 = sbr.rel (%p751) target = $region104
              $region101: #{gqa_forward.6} parent=96 // loop_body
                %v757 = vld [vmem:[%s755] sm:$0x3]
                %758 = vst [vmem:[%s756] sm:$0x3] %v757
                %v759 = vld [vmem:[%s755 + $0x2] sm:$0x3]
                %760 = vst [vmem:[%s756 + $0x4] sm:$0x3] %v759
                %v761 = vld [vmem:[%s755 + $0x4] sm:$0x3]
                %762 = vst [vmem:[%s756 + $0x8] sm:$0x3] %v761
                %v763 = vld [vmem:[%s755 + $0x6] sm:$0x3]
                %764 = vst [vmem:[%s756 + $0xc] sm:$0x3] %v763
                %v765 = vld [vmem:[%s755 + $0x8] sm:$0x3]
                %766 = vst [vmem:[%s756 + $0x10] sm:$0x3] %v765
                %v767 = vld [vmem:[%s755 + $0xa] sm:$0x3]
                %768 = vst [vmem:[%s756 + $0x14] sm:$0x3] %v767
                %v769 = vld [vmem:[%s755 + $0xc] sm:$0x3]
                %770 = vst [vmem:[%s756 + $0x18] sm:$0x3] %v769
                %v771 = vld [vmem:[%s755 + $0xe] sm:$0x3]
                %772 = vst [vmem:[%s756 + $0x1c] sm:$0x3] %v771
              $region102: #{gqa_forward.6} parent=96 // loop_footer
                %s754 = sadd.s32 1, %s750
              $region103: #{gqa_forward.6} parent=96 // loop_footer_branch
                %749 = sbr.rel target = $region99
              $region104: #{gqa_forward.6} parent=96 // loop_exit
                _
            $region97: #{gqa_forward.6} parent=88 // pred_fallthru
              _
          $region89: #{gqa_forward.6} parent=84 // pred_fallthru
            _
          %808 = vnop
        $region85: #{gqa_forward.6} parent=68 // pred_fallthru
          _
      $region69: #{gqa_forward.6} parent=5 // pred_fallthru
        _
      %p809 = scmp.le.s32.totalorder 2, %s9
      // Predicated region
      $region123: #{gqa_forward.6} parent=5 // pred_check
        %p810 = pneg %p809
      $region124: #{gqa_forward.6} parent=5 // pred_check_branch
        %812 = sbr.rel (%p810) target = $region126
      $region125: #{gqa_forward.6} parent=5 // pred_region
        %s813 = ssub.s32 %s9, 2
        // Predicated region
        $region127: #{gqa_forward.6} parent=125 // pred_check
          %p814 = pneg %p158
        $region128: #{gqa_forward.6} parent=125 // pred_check_branch
          %816 = sbr.rel (%p814) target = $region130
        $region129: #{gqa_forward.6} parent=125 // pred_region
          %s817 = sand.u32 %s143, 1
          %s818 = sand.u32 %s143, 1
          %s819 = smul.addr %s818, 16
          %s820 = scalar_lea.vmem [#allocation6], %s819
        $region130: #{gqa_forward.6} parent=125 // pred_fallthru
          _
      $region126: #{gqa_forward.6} parent=5 // pred_fallthru
        _
    $region6: #{gqa_forward.6} parent=1 // loop_footer
      %s13 = sadd.s32 1, %s9
    $region7: #{gqa_forward.6} parent=1 // loop_footer_branch
      %8 = sbr.rel target = $region3
    $region8: #{gqa_forward.6} parent=1 // loop_exit
      _

</llo_original>
